<compile_context>
chip_gen: v5e
topology: v5e:2x2
jax: 0.10.0
libtpu: 0.0.40
codegen_flags: <defaults>
</compile_context>

<pallas_src>
import jax
import jax.numpy as jnp
from jax.experimental import pallas as pl
from jax.experimental.pallas import tpu as pltpu


# ----------------------------------------------------------------------------
# Kernel
# ----------------------------------------------------------------------------
def _fused_attention_kernel(key_ref, value_ref, wk_ref, wv_ref, wa_ref, out_ref):
    """One grid step = TB batch rows; both additive-attention heads fused.

    key_ref   : VMEM (TB, Dk)
    value_ref : VMEM (TB, T, Dv)
    wk_ref    : VMEM (Dk, Hf)   Hf = LFP + CAD  (fused key projections)
    wv_ref    : VMEM (Dv, Hf)                   (fused value projections)
    wa_ref    : VMEM (Hf, 128)  block-diagonal score weights
                                (col 0 = LFP head, col 1 = CAD head, rest zero)
    out_ref   : VMEM (TB, SLAB) lane-dense packed [dga_w | kea_w | kea_ctx | 0]
    """
    key = key_ref[...]                       # (TB, Dk)
    value = value_ref[...]                   # (TB, T, Dv)
    tb, t, dv = value.shape
    hf = wk_ref.shape[1]

    # --- fused projections on the MXU (N = Hf = 1536, lane dense) -----------
    kp = jnp.dot(key, wk_ref[...], preferred_element_type=jnp.float32)          # (TB, Hf)
    # NOTE: T is a multiple of 8 here, so merging (TB, T) into the sublane axis
    # is a free relayout; pad T in the wrapper for general sequence lengths.
    vp = jnp.dot(value.reshape(tb * t, dv), wv_ref[...],
                 preferred_element_type=jnp.float32)                            # (TB*T, Hf)
    inter = jnp.tanh(vp.reshape(tb, t, hf) + kp[:, None, :])                    # (TB, T, Hf)

    # --- both heads' scores with ONE MXU matmul (block-diagonal wa) ---------
    scores = jnp.dot(inter.reshape(tb * t, hf), wa_ref[...],
                     preferred_element_type=jnp.float32)                        # (TB*T, 128)
    s = scores[:, 0:2].reshape(tb, t, 2)                                        # (TB, T, 2)

    # --- softmax over the sequence axis for both heads at once --------------
    m = jnp.max(s, axis=1, keepdims=True)
    e = jnp.exp(s - m)
    denom = jnp.sum(e, axis=1, keepdims=True)
    w_both = e * pl.reciprocal(denom, approx=True)                              # (TB, T, 2)

    dga_w = w_both[:, :, 0]                                                     # (TB, T)
    kea_w = w_both[:, :, 1]                                                     # (TB, T)
    # Only the KEA context is needed: the module discards the DGA context.
    kea_ctx = jnp.sum(value.astype(jnp.float32) * kea_w[:, :, None], axis=1)    # (TB, Dv)

    # Pack outputs into one lane-dense slab (single 128-wide writeback DMA).
    out_ref[...] = jnp.zeros_like(out_ref)
    out_ref[:, 0:t] = dga_w.astype(out_ref.dtype)
    out_ref[:, t:2 * t] = kea_w.astype(out_ref.dtype)
    out_ref[:, 2 * t:2 * t + dv] = kea_ctx.astype(out_ref.dtype)


# ----------------------------------------------------------------------------
# Generation-aware sizing helpers
# ----------------------------------------------------------------------------
def _vmem_limits():
    """(vmem_limit_bytes for the compiler, intermediate budget for tiling)."""
    try:
        phys = int(pltpu.get_tpu_info().vmem_capacity_bytes)   # 128 MiB v5e/v6e, 64 MiB v7x
    except Exception:  # pragma: no cover - conservative fallback
        phys = 64 << 20
    limit = max(32 << 20, min(phys - (16 << 20), 96 << 20))
    budget = limit // 3          # conservative: double buffering + live heads
    return limit, budget


def _pick_batch_tile(B, per_row_bytes, budget_bytes, target_tb=256):
    """Batch tile: multiple of 8 (or B itself for tiny batches), sized to fill
    the MXU M dimension up to `target_tb` while staying under the VMEM budget,
    and keeping >=2 grid steps when B allows (v7x has 2 TensorCores)."""
    if B <= 8:
        return B
    tb = 8
    while tb * 2 <= min(B, target_tb) and (tb * 2) * per_row_bytes <= budget_bytes:
        tb *= 2
    if tb >= B and B >= 16:
        tb = max(8, (B // 2) // 8 * 8)
    return tb


# ----------------------------------------------------------------------------
# Wrapper: one fused pallas_call for both attention heads
# ----------------------------------------------------------------------------
def fused_additive_attention(key_tensor, value_tensor,
                             wk_lfp, wv_lfp, wa_lfp,
                             wk_cad, wv_cad, wa_cad):
    """Returns (dga_weights, kea_context, kea_weights).

    Weight conventions (matching nn.Linear(in, out, bias=False)):
      wk_* : (key_dim,   H) == weight.T of key_{lfp,cad}
      wv_* : (value_dim, H) == weight.T of value_{lfp,cad}
      wa_* : (1, H)         == raw weight of attention_{lfp,cad}
    The DGA context is never computed (IUXrayAttentionModule discards it).
    """
    B, Dk = key_tensor.shape
    Bv, T, Dv = value_tensor.shape
    assert Bv == B
    LFP = wk_lfp.shape[1]
    CAD = wk_cad.shape[1]
    Hf = LFP + CAD

    f32 = jnp.float32
    # Fused projection weights: one kp matmul, one vp matmul for both heads.
    wk_f = jnp.concatenate([wk_lfp, wk_cad], axis=1).astype(f32)      # (Dk, Hf)
    wv_f = jnp.concatenate([wv_lfp, wv_cad], axis=1).astype(f32)      # (Dv, Hf)
    # Block-diagonal score weights, padded to 128 lanes for a lane-dense matmul.
    wa_f = jnp.zeros((Hf, 128), f32)
    wa_f = wa_f.at[:LFP, 0].set(wa_lfp.reshape(-1).astype(f32))
    wa_f = wa_f.at[LFP:, 1].set(wa_cad.reshape(-1).astype(f32))

    # Lane-dense packed output slab: [dga_w (T) | kea_w (T) | kea_ctx (Dv) | pad]
    SLAB = ((2 * T + Dv + 127) // 128) * 128

    vmem_limit, budget = _vmem_limits()
    # Per-batch-row f32 footprint of in-flight intermediates: vp + tanh slabs,
    # double-buffered value/key blocks and output slab, score/weight slop.
    per_row_bytes = 4 * (2 * T * Hf + 2 * T * Dv + 2 * Dk + 2 * SLAB + T * 128)
    TB = _pick_batch_tile(B, per_row_bytes, budget)
    grid = (pl.cdiv(B, TB),)

    grid_spec = pltpu.PrefetchScalarGridSpec(
        num_scalar_prefetch=0,
        grid=grid,
        in_specs=[
            pl.BlockSpec((TB, Dk), lambda b: (b, 0)),
            pl.BlockSpec((TB, T, Dv), lambda b: (b, 0, 0)),
            pl.BlockSpec((Dk, Hf), lambda b: (0, 0)),       # VMEM-resident weights
            pl.BlockSpec((Dv, Hf), lambda b: (0, 0)),
            pl.BlockSpec((Hf, 128), lambda b: (0, 0)),
        ],
        out_specs=pl.BlockSpec((TB, SLAB), lambda b: (b, 0)),
    )

    slab = pl.pallas_call(
        _fused_attention_kernel,
        out_shape=jax.ShapeDtypeStruct((B, SLAB), jnp.float32),
        grid_spec=grid_spec,
        compiler_params=pltpu.CompilerParams(
            dimension_semantics=("parallel",),
            vmem_limit_bytes=vmem_limit),
    )(key_tensor, value_tensor, wk_f, wv_f, wa_f)

    dga_w = slab[:, 0:T]
    kea_w = slab[:, T:2 * T]
    kea_ctx = slab[:, 2 * T:2 * T + Dv].astype(value_tensor.dtype)
    return dga_w, kea_ctx, kea_w


# ----------------------------------------------------------------------------
# Module-level forward (mirrors IUXrayAttentionModule.forward)
# ----------------------------------------------------------------------------
def iu_xray_attention_module_forward(iu_xray_identifiers, feature_maps,
                                     key_tensor, value_tensor,
                                     wk_lfp, wv_lfp, wa_lfp,
                                     wk_cad, wv_cad, wa_cad):
    # `self.contextual_attention` is undefined in the PyTorch __init__; the only
    # matching submodule is DynamicGraphAttension, so we map it there.
    dga_w, kea_ctx, kea_w = fused_additive_attention(
        key_tensor, value_tensor,
        wk_lfp, wv_lfp, wa_lfp, wk_cad, wv_cad, wa_cad)

    results = {}
    for identifier in iu_xray_identifiers:
        results[identifier] = {
            # TODO(synk): `self.class_attention` is referenced in forward() but never
            # defined in the PyTorch module's __init__; feature_maps passed through.
            'class_wise_features': feature_maps,
            ' DynamicGraphAttension_weights': dga_w,
            'key_event_attention_context': kea_ctx,
            'key_event_attention_weights': kea_w,
        }
    return results


# ----------------------------------------------------------------------------
# Plain-JAX reference (transcription of the PyTorch attention heads)
# ----------------------------------------------------------------------------
def _reference_head(key_tensor, value_tensor, wk, wv, wa):
    kp = key_tensor @ wk                                        # (B, H)
    vp = jnp.einsum('btd,dh->bth', value_tensor, wv)            # (B, T, H)
    inter = jnp.tanh(kp[:, None, :] + vp)                       # (B, T, H)
    scores = jnp.einsum('bth,h->bt', inter, wa[0])              # (B, T)
    w = jax.nn.softmax(scores, axis=1)                          # (B, T)
    ctx = jnp.sum(value_tensor * w[:, :, None], axis=1)         # (B, Dv)
    return ctx, w


# ----------------------------------------------------------------------------
# Demo / self-test
# ----------------------------------------------------------------------------
if __name__ == "__main__":
    B, T = 2, 8
    KEY_DIM, VALUE_DIM = 32, 32
    LFP, CAD = 512, 1024

    root = jax.random.PRNGKey(0)
    ks = jax.random.split(root, 9)

    key_tensor = jax.random.normal(ks[0], (B, KEY_DIM), jnp.float32)
    value_tensor = jax.random.normal(ks[1], (B, T, VALUE_DIM), jnp.float32)
    feature_maps = jax.random.normal(ks[2], (B, 4, 16, 16), jnp.float32)

    def scale(fan_in):
        return 1.0 / jnp.sqrt(jnp.float32(fan_in))

    # nn.Linear(in, out, bias=False) weights, stored as (in, out) = weight.T
    wk_lfp = jax.random.normal(ks[3], (KEY_DIM, LFP), jnp.float32) * scale(KEY_DIM)
    wv_lfp = jax.random.normal(ks[4], (VALUE_DIM, LFP), jnp.float32) * scale(VALUE_DIM)
    wa_lfp = jax.random.normal(ks[5], (1, LFP), jnp.float32) * scale(LFP)
    wk_cad = jax.random.normal(ks[6], (KEY_DIM, CAD), jnp.float32) * scale(KEY_DIM)
    wv_cad = jax.random.normal(ks[7], (VALUE_DIM, CAD), jnp.float32) * scale(VALUE_DIM)
    wa_cad = jax.random.normal(ks[8], (1, CAD), jnp.float32) * scale(CAD)

    identifiers = ("iu_xray_frontal", "iu_xray_lateral")

    results = iu_xray_attention_module_forward(
        identifiers, feature_maps, key_tensor, value_tensor,
        wk_lfp, wv_lfp, wa_lfp, wk_cad, wv_cad, wa_cad)
    results = jax.block_until_ready(results)

    # Correctness check vs. plain-JAX reference
    _, dga_w_ref = _reference_head(key_tensor, value_tensor, wk_lfp, wv_lfp, wa_lfp)
    kea_ctx_ref, kea_w_ref = _reference_head(key_tensor, value_tensor, wk_cad, wv_cad, wa_cad)

    r = results[identifiers[0]]
    assert r['class_wise_features'].shape == (B, 4, 16, 16)
    assert r[' DynamicGraphAttension_weights'].shape == (B, T)
    assert r['key_event_attention_context'].shape == (B, VALUE_DIM)
    assert r['key_event_attention_weights'].shape == (B, T)

    # Tolerance accommodates the approx-EUP reciprocal in the softmax.
    assert jnp.allclose(r[' DynamicGraphAttension_weights'], dga_w_ref,
                        atol=2e-3, rtol=2e-3), "DGA weights mismatch"
    assert jnp.allclose(r['key_event_attention_context'], kea_ctx_ref,
                        atol=2e-3, rtol=2e-3), "KEA context mismatch"
    assert jnp.allclose(r['key_event_attention_weights'], kea_w_ref,
                        atol=2e-3, rtol=2e-3), "KEA weights mismatch"
    # Every identifier holds the same (shared) results, as in the original loop.
    for ident in identifiers:
        assert results[ident]['key_event_attention_weights'] is r['key_event_attention_weights']

    print("KERNEL_OK")
</pallas_src>

<mosaic_0001>
module attributes {stable_mosaic.version = 11 : i64} {
  func.func @_fused_attention_kernel(%arg0: i32, %arg1: memref<2x32xf32, #tpu.memory_space<vmem>>, %arg2: memref<2x8x32xf32, #tpu.memory_space<vmem>>, %arg3: memref<32x1536xf32, #tpu.memory_space<vmem>>, %arg4: memref<32x1536xf32, #tpu.memory_space<vmem>>, %arg5: memref<1536x128xf32, #tpu.memory_space<vmem>>, %arg6: memref<2x128xf32, #tpu.memory_space<vmem>>) attributes {dimension_semantics = [#tpu.dimension_semantics<parallel>], iteration_bounds = array<i64: 1>, scalar_prefetch = 0 : i64, scratch_operands = 0 : i64, tpu.core_type = #tpu.core_type<tc>, window_params = [{transform_indices = @transform_0, window_bounds = array<i64: 2, 32>}, {transform_indices = @transform_1, window_bounds = array<i64: 2, 8, 32>}, {pipeline_mode = #tpu.pipeline_mode<synchronous>, transform_indices = @transform_2, window_bounds = array<i64: 32, 1536>}, {pipeline_mode = #tpu.pipeline_mode<synchronous>, transform_indices = @transform_3, window_bounds = array<i64: 32, 1536>}, {pipeline_mode = #tpu.pipeline_mode<synchronous>, transform_indices = @transform_4, window_bounds = array<i64: 1536, 128>}, {transform_indices = @transform_5, window_bounds = array<i64: 2, 128>}]} {
    %c0 = arith.constant 0 : index
    %c0_0 = arith.constant 0 : index
    %0 = vector.load %arg1[%c0, %c0_0] : memref<2x32xf32, #tpu.memory_space<vmem>>, vector<2x32xf32>
    %c0_1 = arith.constant 0 : index
    %c0_2 = arith.constant 0 : index
    %c0_3 = arith.constant 0 : index
    %1 = vector.load %arg2[%c0_1, %c0_2, %c0_3] : memref<2x8x32xf32, #tpu.memory_space<vmem>>, vector<2x8x32xf32>
    %c0_4 = arith.constant 0 : index
    %c0_5 = arith.constant 0 : index
    %2 = vector.load %arg3[%c0_4, %c0_5] : memref<32x1536xf32, #tpu.memory_space<vmem>>, vector<32x1536xf32>
    %cst = arith.constant dense<0.000000e+00> : vector<2x1536xf32>
    %3 = tpu.matmul %0, %2, %cst {dimension_numbers = #tpu.dot_dimension_numbers<[1], [0], [0], [1], [0, 0, 1, 1], [], []>} : vector<2x32xf32>, vector<32x1536xf32>, vector<2x1536xf32> -> vector<2x1536xf32>
    %4 = vector.shape_cast %1 : vector<2x8x32xf32> to vector<16x32xf32>
    %c0_6 = arith.constant 0 : index
    %c0_7 = arith.constant 0 : index
    %5 = vector.load %arg4[%c0_6, %c0_7] : memref<32x1536xf32, #tpu.memory_space<vmem>>, vector<32x1536xf32>
    %cst_8 = arith.constant dense<0.000000e+00> : vector<16x1536xf32>
    %6 = tpu.matmul %4, %5, %cst_8 {dimension_numbers = #tpu.dot_dimension_numbers<[1], [0], [0], [1], [0, 0, 1, 1], [], []>} : vector<16x32xf32>, vector<32x1536xf32>, vector<16x1536xf32> -> vector<16x1536xf32>
    %7 = vector.shape_cast %6 : vector<16x1536xf32> to vector<2x8x1536xf32>
    %8 = vector.shape_cast %3 : vector<2x1536xf32> to vector<2x1x1536xf32>
    %9 = vector.broadcast %8 : vector<2x1x1536xf32> to vector<2x8x1536xf32>
    %10 = arith.addf %7, %9 : vector<2x8x1536xf32>
    %11 = math.tanh %10 : vector<2x8x1536xf32>
    %12 = vector.shape_cast %11 : vector<2x8x1536xf32> to vector<16x1536xf32>
    %c0_9 = arith.constant 0 : index
    %c0_10 = arith.constant 0 : index
    %13 = vector.load %arg5[%c0_9, %c0_10] : memref<1536x128xf32, #tpu.memory_space<vmem>>, vector<1536x128xf32>
    %cst_11 = arith.constant dense<0.000000e+00> : vector<16x128xf32>
    %14 = tpu.matmul %12, %13, %cst_11 {dimension_numbers = #tpu.dot_dimension_numbers<[1], [0], [0], [1], [0, 0, 1, 1], [], []>} : vector<16x1536xf32>, vector<1536x128xf32>, vector<16x128xf32> -> vector<16x128xf32>
    %15 = vector.extract_strided_slice %14 {offsets = [0, 0], sizes = [16, 2], strides = [1, 1]} : vector<16x128xf32> to vector<16x2xf32>
    %16 = vector.shape_cast %15 : vector<16x2xf32> to vector<2x8x2xf32>
    %cst_12 = arith.constant dense<0xFF800000> : vector<2x2xf32>
    %17 = vector.multi_reduction <maximumf>, %16, %cst_12 [1] : vector<2x8x2xf32> to vector<2x2xf32>
    %18 = vector.shape_cast %17 : vector<2x2xf32> to vector<2x1x2xf32>
    %19 = vector.broadcast %18 : vector<2x1x2xf32> to vector<2x8x2xf32>
    %20 = arith.subf %16, %19 : vector<2x8x2xf32>
    %21 = math.exp %20 : vector<2x8x2xf32>
    %cst_13 = arith.constant dense<0.000000e+00> : vector<2x2xf32>
    %22 = vector.multi_reduction <add>, %21, %cst_13 [1] : vector<2x8x2xf32> to vector<2x2xf32>
    %23 = vector.shape_cast %22 : vector<2x2xf32> to vector<2x1x2xf32>
    %24 = tpu.reciprocal %23 {approx = true} : vector<2x1x2xf32> -> vector<2x1x2xf32>
    %25 = vector.broadcast %24 : vector<2x1x2xf32> to vector<2x8x2xf32>
    %26 = arith.mulf %21, %25 : vector<2x8x2xf32>
    %27 = vector.extract_strided_slice %26 {offsets = [0, 0, 0], sizes = [2, 8, 1], strides = [1, 1, 1]} : vector<2x8x2xf32> to vector<2x8x1xf32>
    %28 = vector.shape_cast %27 : vector<2x8x1xf32> to vector<2x8xf32>
    %29 = vector.extract_strided_slice %26 {offsets = [0, 0, 1], sizes = [2, 8, 1], strides = [1, 1, 1]} : vector<2x8x2xf32> to vector<2x8x1xf32>
    %30 = vector.shape_cast %29 : vector<2x8x1xf32> to vector<2x8xf32>
    %31 = vector.shape_cast %30 : vector<2x8xf32> to vector<2x8x1xf32>
    %32 = vector.broadcast %31 : vector<2x8x1xf32> to vector<2x8x32xf32>
    %33 = arith.mulf %1, %32 : vector<2x8x32xf32>
    %cst_14 = arith.constant dense<0.000000e+00> : vector<2x32xf32>
    %34 = vector.multi_reduction <add>, %33, %cst_14 [1] : vector<2x8x32xf32> to vector<2x32xf32>
    %cst_15 = arith.constant 0.000000e+00 : f32
    %35 = vector.broadcast %cst_15 : f32 to vector<2x128xf32>
    %c0_16 = arith.constant 0 : index
    %c0_17 = arith.constant 0 : index
    %36 = vector.load %arg6[%c0_16, %c0_17] : memref<2x128xf32, #tpu.memory_space<vmem>>, vector<2x128xf32>
    tpu.vector_store %arg6[%c0_16, %c0_17], %35 {strides = array<i32>} : memref<2x128xf32, #tpu.memory_space<vmem>>, vector<2x128xf32>,
    %c0_18 = arith.constant 0 : index
    %c0_19 = arith.constant 0 : index
    %37 = vector.load %arg6[%c0_18, %c0_19] : memref<2x128xf32, #tpu.memory_space<vmem>>, vector<2x8xf32>
    tpu.vector_store %arg6[%c0_18, %c0_19], %28 {strides = array<i32>} : memref<2x128xf32, #tpu.memory_space<vmem>>, vector<2x8xf32>,
    %c0_20 = arith.constant 0 : index
    %c8 = arith.constant 8 : index
    %38 = vector.load %arg6[%c0_20, %c8] : memref<2x128xf32, #tpu.memory_space<vmem>>, vector<2x8xf32>
    tpu.vector_store %arg6[%c0_20, %c8], %30 {strides = array<i32>} : memref<2x128xf32, #tpu.memory_space<vmem>>, vector<2x8xf32>,
    %c0_21 = arith.constant 0 : index
    %c16 = arith.constant 16 : index
    %39 = vector.load %arg6[%c0_21, %c16] : memref<2x128xf32, #tpu.memory_space<vmem>>, vector<2x32xf32>
    tpu.vector_store %arg6[%c0_21, %c16], %34 {strides = array<i32>} : memref<2x128xf32, #tpu.memory_space<vmem>>, vector<2x32xf32>,
    return
  }
  func.func @transform_0(%arg0: i32) -> (i32, i32) {
    %c0_i32 = arith.constant 0 : i32
    %c0_i32_0 = arith.constant 0 : i32
    return %arg0, %c0_i32 : i32, i32
  }
  func.func @transform_1(%arg0: i32) -> (i32, i32, i32) {
    %c0_i32 = arith.constant 0 : i32
    %c0_i32_0 = arith.constant 0 : i32
    %c0_i32_1 = arith.constant 0 : i32
    return %arg0, %c0_i32, %c0_i32_0 : i32, i32, i32
  }
  func.func @transform_2(%arg0: i32) -> (i32, i32) {
    %c0_i32 = arith.constant 0 : i32
    %c0_i32_0 = arith.constant 0 : i32
    %c0_i32_1 = arith.constant 0 : i32
    return %c0_i32, %c0_i32_0 : i32, i32
  }
  func.func @transform_3(%arg0: i32) -> (i32, i32) {
    %c0_i32 = arith.constant 0 : i32
    %c0_i32_0 = arith.constant 0 : i32
    %c0_i32_1 = arith.constant 0 : i32
    return %c0_i32, %c0_i32_0 : i32, i32
  }
  func.func @transform_4(%arg0: i32) -> (i32, i32) {
    %c0_i32 = arith.constant 0 : i32
    %c0_i32_0 = arith.constant 0 : i32
    %c0_i32_1 = arith.constant 0 : i32
    return %c0_i32, %c0_i32_0 : i32, i32
  }
  func.func @transform_5(%arg0: i32) -> (i32, i32) {
    %c0_i32 = arith.constant 0 : i32
    %c0_i32_0 = arith.constant 0 : i32
    return %arg0, %c0_i32 : i32, i32
  }
}

</mosaic_0001>

<llo_original>
// kernel: tpu_custom_call.1
$region0: #{tpu_custom_call.1}
  #allocation0 [shape = 'u32[]', space=smem, size = 0x4, offset = 0x4, fixed_abs, tag = 'smem constant byte address 0x4 - core index']
  #allocation1 [shape = 'u32[72,128]{1,0:T(1,128)}', space=vmem, size = 0x9000, scoped, tag = 'internal scratch']
  %s0 = inlined_call_operand.hbm [shape: f32[2,32], index: 0, kind: input, shape index: {}]
  %s1 = inlined_call_operand.hbm [shape: f32[2,8,32], index: 1, kind: input, shape index: {}]
  %s2 = inlined_call_operand.hbm [shape: f32[32,1536], index: 2, kind: input, shape index: {}]
  %s3 = inlined_call_operand.hbm [shape: f32[32,1536], index: 3, kind: input, shape index: {}]
  %s4 = inlined_call_operand.hbm [shape: f32[1536,128], index: 4, kind: input, shape index: {}]
  %s5 = inlined_call_operand.hbm [shape: f32[2,128], index: 5, kind: output, shape index: {}]
  %s6 = sld [smem:[#allocation0]]
  $region50: #{tpu_custom_call.1} parent=0
    _
  %s8 = ssub.s32 1, %s6
  %s9 = scalar_select 0, %s8, %s6
  $region1: #{tpu_custom_call.1} parent=0
    #allocation2 [shape = 'u8[1024]{0}', space=vmem, size = 0x400, scoped, tag = 'input window, operand 0, single buffered']
    #allocation3 [shape = 's32[1]{0}', space=sflag, size = 0x4, scoped, tag = 'scoped memory for tpu_custom_call.1']
    #allocation4 [shape = 's32[1]{0}', space=sflag, size = 0x4, scoped, tag = 'scoped memory for tpu_custom_call.1']
    #allocation5 [shape = 'u8[8192]{0}', space=vmem, size = 0x2000, scoped, tag = 'input window, operand 1, single buffered']
    #allocation6 [shape = 's32[1]{0}', space=sflag, size = 0x4, scoped, tag = 'scoped memory for tpu_custom_call.1']
    #allocation7 [shape = 'u8[196608]{0}', space=vmem, size = 0x30000, scoped, tag = 'input window, operand 2, single buffered']
    #allocation8 [shape = 'u8[196608]{0}', space=vmem, size = 0x30000, scoped, tag = 'input window, operand 3, single buffered']
    #allocation9 [shape = 's32[1]{0}', space=sflag, size = 0x4, scoped, tag = 'scoped memory for tpu_custom_call.1']
    #allocation10 [shape = 'u8[786432]{0}', space=vmem, size = 0xc0000, scoped, tag = 'input window, operand 4, single buffered']
    #allocation11 [shape = 'u8[1024]{0}', space=vmem, size = 0x400, scoped, tag = 'output window, operand 0, single buffered']
    %10 = vsyncpa [#allocation3], 0
    %11 = vsyncpa [#allocation6], 0
    %12 = vsyncpa [#allocation9], 0
    %13 = vsyncpa [#allocation4], 0
    // Predicated region
    $region2: #{tpu_custom_call.1} parent=1 // pred_check
      _
    $region3: #{tpu_custom_call.1} parent=1 // pred_check_branch
      %15 = sbr.rel (0) target = $region5
    $region4: #{tpu_custom_call.1} parent=1 // pred_region
      %17 = vsyncadd [#allocation3], 0
      %s19 = sshll.u32 %s0, 4
      %s20 = int_to_ptr.hbm [resolvable:$true] %s19
      %s21 = sshll.u32 [#allocation2], 4
      %s22 = int_to_ptr.vmem [resolvable:$true] %s21
      %24 = dma.hbm_to_vmem [thread:$0]  %s20, 32, %s22, [#allocation3]
    $region5: #{tpu_custom_call.1} parent=1 // pred_fallthru
      _
    // Predicated region
    $region6: #{tpu_custom_call.1} parent=1 // pred_check
      _
    $region7: #{tpu_custom_call.1} parent=1 // pred_check_branch
      %26 = sbr.rel (0) target = $region9
    $region8: #{tpu_custom_call.1} parent=1 // pred_region
      %28 = vsyncadd [#allocation6], 0
      %s29 = sshll.u32 %s1, 4
      %s30 = int_to_ptr.hbm [resolvable:$true] %s29
      %s31 = sshll.u32 [#allocation5], 4
      %s32 = int_to_ptr.vmem [resolvable:$true] %s31
      %37 = dma.hbm_to_vmem [thread:$0]  %s30, 256, %s32, [#allocation6], 128, 128, 8
    $region9: #{tpu_custom_call.1} parent=1 // pred_fallthru
      _
    // Predicated region
    $region10: #{tpu_custom_call.1} parent=1 // pred_check
      _
    $region11: #{tpu_custom_call.1} parent=1 // pred_check_branch
      %39 = sbr.rel (0) target = $region13
    $region12: #{tpu_custom_call.1} parent=1 // pred_region
      %41 = vsyncadd [#allocation6], 0
      %s42 = sshll.u32 %s2, 4
      %s43 = int_to_ptr.hbm [resolvable:$true] %s42
      %s44 = sshll.u32 [#allocation7], 4
      %s45 = int_to_ptr.vmem [resolvable:$true] %s44
      %50 = dma.hbm_to_vmem [thread:$0]  %s43, 6144, %s45, [#allocation6], 1536, 1536, 96
    $region13: #{tpu_custom_call.1} parent=1 // pred_fallthru
      _
    // Predicated region
    $region14: #{tpu_custom_call.1} parent=1 // pred_check
      _
    $region15: #{tpu_custom_call.1} parent=1 // pred_check_branch
      %52 = sbr.rel (0) target = $region17
    $region16: #{tpu_custom_call.1} parent=1 // pred_region
      %54 = vsyncadd [#allocation9], 0
      %s55 = sshll.u32 %s3, 4
      %s56 = int_to_ptr.hbm [resolvable:$true] %s55
      %s57 = sshll.u32 [#allocation8], 4
      %s58 = int_to_ptr.vmem [resolvable:$true] %s57
      %63 = dma.hbm_to_vmem [thread:$0]  %s56, 6144, %s58, [#allocation9], 1536, 1536, 96
    $region17: #{tpu_custom_call.1} parent=1 // pred_fallthru
      _
    // Predicated region
    $region18: #{tpu_custom_call.1} parent=1 // pred_check
      _
    $region19: #{tpu_custom_call.1} parent=1 // pred_check_branch
      %65 = sbr.rel (0) target = $region21
    $region20: #{tpu_custom_call.1} parent=1 // pred_region
      %67 = vsyncadd [#allocation9], 0
      %s68 = sshll.u32 %s4, 4
      %s69 = int_to_ptr.hbm [resolvable:$true] %s68
      %s70 = sshll.u32 [#allocation10], 4
      %s71 = int_to_ptr.vmem [resolvable:$true] %s70
      %76 = dma.hbm_to_vmem [thread:$0]  %s69, 24576, %s71, [#allocation9], 128, 128, 8
    $region21: #{tpu_custom_call.1} parent=1 // pred_fallthru
      _
    // Predicated region
    $region22: #{tpu_custom_call.1} parent=1 // pred_check
      _
    $region23: #{tpu_custom_call.1} parent=1 // pred_check_branch
      %78 = sbr.rel (0) target = $region25
    $region24: #{tpu_custom_call.1} parent=1 // pred_region
      %80 = dma.done [#allocation3], 32
    $region25: #{tpu_custom_call.1} parent=1 // pred_fallthru
      _
    // Predicated region
    $region26: #{tpu_custom_call.1} parent=1 // pred_check
      _
    $region27: #{tpu_custom_call.1} parent=1 // pred_check_branch
      %82 = sbr.rel (0) target = $region29
    $region28: #{tpu_custom_call.1} parent=1 // pred_region
      %84 = dma.done [#allocation6], 256
    $region29: #{tpu_custom_call.1} parent=1 // pred_fallthru
      _
    // Predicated region
    $region30: #{tpu_custom_call.1} parent=1 // pred_check
      _
    $region31: #{tpu_custom_call.1} parent=1 // pred_check_branch
      %86 = sbr.rel (0) target = $region33
    $region32: #{tpu_custom_call.1} parent=1 // pred_region
      %88 = dma.done [#allocation6], 6144
    $region33: #{tpu_custom_call.1} parent=1 // pred_fallthru
      _
    // Predicated region
    $region34: #{tpu_custom_call.1} parent=1 // pred_check
      _
    $region35: #{tpu_custom_call.1} parent=1 // pred_check_branch
      %90 = sbr.rel (0) target = $region37
    $region36: #{tpu_custom_call.1} parent=1 // pred_region
      %92 = dma.done [#allocation9], 6144
    $region37: #{tpu_custom_call.1} parent=1 // pred_fallthru
      _
    // Predicated region
    $region38: #{tpu_custom_call.1} parent=1 // pred_check
      _
    $region39: #{tpu_custom_call.1} parent=1 // pred_check_branch
      %94 = sbr.rel (0) target = $region41
    $region40: #{tpu_custom_call.1} parent=1 // pred_region
      %96 = dma.done [#allocation9], 24576
    $region41: #{tpu_custom_call.1} parent=1 // pred_fallthru
      _
    %v97 = vld [vmem:[#allocation2] sm:$0x3]
    %v98 = vld [vmem:[#allocation5] sm:$0xff]
    %v99 = vld [vmem:[#allocation5 + $0x8] sm:$0xff]
    %v100 = vld [vmem:[#allocation7] sm:$0xff]
    %v101 = vld [vmem:[#allocation7 + $0x8] sm:$0xff]
    %v102 = vld [vmem:[#allocation7 + $0x10] sm:$0xff]
    %v103 = vld [vmem:[#allocation7 + $0x18] sm:$0xff]
    %v104 = vld [vmem:[#allocation7 + $0x20] sm:$0xff]
    %v105 = vld [vmem:[#allocation7 + $0x28] sm:$0xff]
    %v106 = vld [vmem:[#allocation7 + $0x30] sm:$0xff]
    %v107 = vld [vmem:[#allocation7 + $0x38] sm:$0xff]
    %v108 = vld [vmem:[#allocation7 + $0x40] sm:$0xff]
    %v109 = vld [vmem:[#allocation7 + $0x48] sm:$0xff]
    %v110 = vld [vmem:[#allocation7 + $0x50] sm:$0xff]
    %v111 = vld [vmem:[#allocation7 + $0x58] sm:$0xff]
    %v112 = vld [vmem:[#allocation7 + $0x60] sm:$0xff]
    %v113 = vld [vmem:[#allocation7 + $0x68] sm:$0xff]
    %v114 = vld [vmem:[#allocation7 + $0x70] sm:$0xff]
    %v115 = vld [vmem:[#allocation7 + $0x78] sm:$0xff]
    %v116 = vld [vmem:[#allocation7 + $0x80] sm:$0xff]
    %v117 = vld [vmem:[#allocation7 + $0x88] sm:$0xff]
    %v118 = vld [vmem:[#allocation7 + $0x90] sm:$0xff]
    %v119 = vld [vmem:[#allocation7 + $0x98] sm:$0xff]
    %v120 = vld [vmem:[#allocation7 + $0xa0] sm:$0xff]
    %v121 = vld [vmem:[#allocation7 + $0xa8] sm:$0xff]
    %v122 = vld [vmem:[#allocation7 + $0xb0] sm:$0xff]
    %v123 = vld [vmem:[#allocation7 + $0xb8] sm:$0xff]
    %v124 = vld [vmem:[#allocation7 + $0xc0] sm:$0xff]
    %v125 = vld [vmem:[#allocation7 + $0xc8] sm:$0xff]
    %v126 = vld [vmem:[#allocation7 + $0xd0] sm:$0xff]
    %v127 = vld [vmem:[#allocation7 + $0xd8] sm:$0xff]
    %v128 = vld [vmem:[#allocation7 + $0xe0] sm:$0xff]
    %v129 = vld [vmem:[#allocation7 + $0xe8] sm:$0xff]
    %v130 = vld [vmem:[#allocation7 + $0xf0] sm:$0xff]
    %v131 = vld [vmem:[#allocation7 + $0xf8] sm:$0xff]
    %v132 = vld [vmem:[#allocation7 + $0x100] sm:$0xff]
    %v133 = vld [vmem:[#allocation7 + $0x108] sm:$0xff]
    %v134 = vld [vmem:[#allocation7 + $0x110] sm:$0xff]
    %v135 = vld [vmem:[#allocation7 + $0x118] sm:$0xff]
    %v136 = vld [vmem:[#allocation7 + $0x120] sm:$0xff]
    %v137 = vld [vmem:[#allocation7 + $0x128] sm:$0xff]
    %v138 = vld [vmem:[#allocation7 + $0x130] sm:$0xff]
    %v139 = vld [vmem:[#allocation7 + $0x138] sm:$0xff]
    %v140 = vld [vmem:[#allocation7 + $0x140] sm:$0xff]
    %v141 = vld [vmem:[#allocation7 + $0x148] sm:$0xff]
    %v142 = vld [vmem:[#allocation7 + $0x150] sm:$0xff]
    %v143 = vld [vmem:[#allocation7 + $0x158] sm:$0xff]
    %v144 = vld [vmem:[#allocation7 + $0x160] sm:$0xff]
    %v145 = vld [vmem:[#allocation7 + $0x168] sm:$0xff]
    %v146 = vld [vmem:[#allocation7 + $0x170] sm:$0xff]
    %v147 = vld [vmem:[#allocation7 + $0x178] sm:$0xff]
    %vm148 = vcmask 261120
    %v150 = vsel %vm148, %v97, 0
    %152 = vmatpush.msra.mxu0 0.0
    %153 = vmatpush.msra.mxu0 0.0
    %154 = vmatpush.msra.mxu0 0.0
    %155 = vmatpush.msra.mxu0 0.0
    %156 = vmatpush.msra.mxu0 0.0
    %157 = vmatpush.msra.mxu0 0.0
    %158 = vmatpush.msra.mxu0 0.0
    %159 = vmatpush.msra.mxu0 0.0
    %160 = vmatpush.msra.mxu0 0.0
    %161 = vmatpush.msra.mxu0 0.0
    %162 = vmatpush.msra.mxu0 0.0
    %163 = vmatpush.msra.mxu0 0.0
    %164 = vmatpush.msra.mxu0 %v136
    %165 = vmatpush.msra.mxu0 %v124
    %166 = vmatpush.msra.mxu0 %v112
    %167 = vmatpush.msra.mxu0 %v100
    %168 = vmatmul.f32.gmra.mxu0 %v150
    %v169 = vpop.f32.mrf.mxu0
    %v170 = vadd.f32 0.0, %v169
    %171 = vdwg.mxu0
    %172 = vmatpush.msra.mxu0 0.0
    %173 = vmatpush.msra.mxu0 0.0
    %174 = vmatpush.msra.mxu0 0.0
    %175 = vmatpush.msra.mxu0 0.0
    %176 = vmatpush.msra.mxu0 0.0
    %177 = vmatpush.msra.mxu0 0.0
    %178 = vmatpush.msra.mxu0 0.0
    %179 = vmatpush.msra.mxu0 0.0
    %180 = vmatpush.msra.mxu0 0.0
    %181 = vmatpush.msra.mxu0 0.0
    %182 = vmatpush.msra.mxu0 0.0
    %183 = vmatpush.msra.mxu0 0.0
    %184 = vmatpush.msra.mxu0 %v137
    %185 = vmatpush.msra.mxu0 %v125
    %186 = vmatpush.msra.mxu0 %v113
    %187 = vmatpush.msra.mxu0 %v101
    %188 = vmatmul.f32.gmra.mxu0 %v150
    %v189 = vpop.f32.mrf.mxu0
    %v190 = vadd.f32 0.0, %v189
    %191 = vdwg.mxu0
    %192 = vmatpush.msra.mxu0 0.0
    %193 = vmatpush.msra.mxu0 0.0
    %194 = vmatpush.msra.mxu0 0.0
    %195 = vmatpush.msra.mxu0 0.0
    %196 = vmatpush.msra.mxu0 0.0
    %197 = vmatpush.msra.mxu0 0.0
    %198 = vmatpush.msra.mxu0 0.0
    %199 = vmatpush.msra.mxu0 0.0
    %200 = vmatpush.msra.mxu0 0.0
    %201 = vmatpush.msra.mxu0 0.0
    %202 = vmatpush.msra.mxu0 0.0
    %203 = vmatpush.msra.mxu0 0.0
    %204 = vmatpush.msra.mxu0 %v138
    %205 = vmatpush.msra.mxu0 %v126
    %206 = vmatpush.msra.mxu0 %v114
    %207 = vmatpush.msra.mxu0 %v102
    %208 = vmatmul.f32.gmra.mxu0 %v150
    %v209 = vpop.f32.mrf.mxu0
    %v210 = vadd.f32 0.0, %v209
    %211 = vdwg.mxu0
    %212 = vmatpush.msra.mxu0 0.0
    %213 = vmatpush.msra.mxu0 0.0
    %214 = vmatpush.msra.mxu0 0.0
    %215 = vmatpush.msra.mxu0 0.0
    %216 = vmatpush.msra.mxu0 0.0
    %217 = vmatpush.msra.mxu0 0.0
    %218 = vmatpush.msra.mxu0 0.0
    %219 = vmatpush.msra.mxu0 0.0
    %220 = vmatpush.msra.mxu0 0.0
    %221 = vmatpush.msra.mxu0 0.0
    %222 = vmatpush.msra.mxu0 0.0
    %223 = vmatpush.msra.mxu0 0.0
    %224 = vmatpush.msra.mxu0 %v139
    %225 = vmatpush.msra.mxu0 %v127
    %226 = vmatpush.msra.mxu0 %v115
    %227 = vmatpush.msra.mxu0 %v103
    %228 = vmatmul.f32.gmra.mxu0 %v150
    %v229 = vpop.f32.mrf.mxu0
    %v230 = vadd.f32 0.0, %v229
    %231 = vdwg.mxu0
    %232 = vmatpush.msra.mxu0 0.0
    %233 = vmatpush.msra.mxu0 0.0
    %234 = vmatpush.msra.mxu0 0.0
    %235 = vmatpush.msra.mxu0 0.0
    %236 = vmatpush.msra.mxu0 0.0
    %237 = vmatpush.msra.mxu0 0.0
    %238 = vmatpush.msra.mxu0 0.0
    %239 = vmatpush.msra.mxu0 0.0
    %240 = vmatpush.msra.mxu0 0.0
    %241 = vmatpush.msra.mxu0 0.0
    %242 = vmatpush.msra.mxu0 0.0
    %243 = vmatpush.msra.mxu0 0.0
    %244 = vmatpush.msra.mxu0 %v140
    %245 = vmatpush.msra.mxu0 %v128
    %246 = vmatpush.msra.mxu0 %v116
    %247 = vmatpush.msra.mxu0 %v104
    %248 = vmatmul.f32.gmra.mxu0 %v150
    %v249 = vpop.f32.mrf.mxu0
    %v250 = vadd.f32 0.0, %v249
    %251 = vdwg.mxu0
    %252 = vmatpush.msra.mxu0 0.0
    %253 = vmatpush.msra.mxu0 0.0
    %254 = vmatpush.msra.mxu0 0.0
    %255 = vmatpush.msra.mxu0 0.0
    %256 = vmatpush.msra.mxu0 0.0
    %257 = vmatpush.msra.mxu0 0.0
    %258 = vmatpush.msra.mxu0 0.0
    %259 = vmatpush.msra.mxu0 0.0
    %260 = vmatpush.msra.mxu0 0.0
    %261 = vmatpush.msra.mxu0 0.0
    %262 = vmatpush.msra.mxu0 0.0
    %263 = vmatpush.msra.mxu0 0.0
    %264 = vmatpush.msra.mxu0 %v141
    %265 = vmatpush.msra.mxu0 %v129
    %266 = vmatpush.msra.mxu0 %v117
    %267 = vmatpush.msra.mxu0 %v105
    %268 = vmatmul.f32.gmra.mxu0 %v150
    %v269 = vpop.f32.mrf.mxu0
    %v270 = vadd.f32 0.0, %v269
    %271 = vdwg.mxu0
    %272 = vmatpush.msra.mxu0 0.0
    %273 = vmatpush.msra.mxu0 0.0
    %274 = vmatpush.msra.mxu0 0.0
    %275 = vmatpush.msra.mxu0 0.0
    %276 = vmatpush.msra.mxu0 0.0
    %277 = vmatpush.msra.mxu0 0.0
    %278 = vmatpush.msra.mxu0 0.0
    %279 = vmatpush.msra.mxu0 0.0
    %280 = vmatpush.msra.mxu0 0.0
    %281 = vmatpush.msra.mxu0 0.0
    %282 = vmatpush.msra.mxu0 0.0
    %283 = vmatpush.msra.mxu0 0.0
    %284 = vmatpush.msra.mxu0 %v142
    %285 = vmatpush.msra.mxu0 %v130
    %286 = vmatpush.msra.mxu0 %v118
    %287 = vmatpush.msra.mxu0 %v106
    %288 = vmatmul.f32.gmra.mxu0 %v150
    %v289 = vpop.f32.mrf.mxu0
    %v290 = vadd.f32 0.0, %v289
    %291 = vdwg.mxu0
    %292 = vmatpush.msra.mxu0 0.0
    %293 = vmatpush.msra.mxu0 0.0
    %294 = vmatpush.msra.mxu0 0.0
    %295 = vmatpush.msra.mxu0 0.0
    %296 = vmatpush.msra.mxu0 0.0
    %297 = vmatpush.msra.mxu0 0.0
    %298 = vmatpush.msra.mxu0 0.0
    %299 = vmatpush.msra.mxu0 0.0
    %300 = vmatpush.msra.mxu0 0.0
    %301 = vmatpush.msra.mxu0 0.0
    %302 = vmatpush.msra.mxu0 0.0
    %303 = vmatpush.msra.mxu0 0.0
    %304 = vmatpush.msra.mxu0 %v143
    %305 = vmatpush.msra.mxu0 %v131
    %306 = vmatpush.msra.mxu0 %v119
    %307 = vmatpush.msra.mxu0 %v107
    %308 = vmatmul.f32.gmra.mxu0 %v150
    %v309 = vpop.f32.mrf.mxu0
    %v310 = vadd.f32 0.0, %v309
    %311 = vdwg.mxu0
    %312 = vmatpush.msra.mxu0 0.0
    %313 = vmatpush.msra.mxu0 0.0
    %314 = vmatpush.msra.mxu0 0.0
    %315 = vmatpush.msra.mxu0 0.0
    %316 = vmatpush.msra.mxu0 0.0
    %317 = vmatpush.msra.mxu0 0.0
    %318 = vmatpush.msra.mxu0 0.0
    %319 = vmatpush.msra.mxu0 0.0
    %320 = vmatpush.msra.mxu0 0.0
    %321 = vmatpush.msra.mxu0 0.0
    %322 = vmatpush.msra.mxu0 0.0
    %323 = vmatpush.msra.mxu0 0.0
    %324 = vmatpush.msra.mxu0 %v144
    %325 = vmatpush.msra.mxu0 %v132
    %326 = vmatpush.msra.mxu0 %v120
    %327 = vmatpush.msra.mxu0 %v108
    %328 = vmatmul.f32.gmra.mxu0 %v150
    %v329 = vpop.f32.mrf.mxu0
    %v330 = vadd.f32 0.0, %v329
    %331 = vdwg.mxu0
    %332 = vmatpush.msra.mxu0 0.0
    %333 = vmatpush.msra.mxu0 0.0
    %334 = vmatpush.msra.mxu0 0.0
    %335 = vmatpush.msra.mxu0 0.0
    %336 = vmatpush.msra.mxu0 0.0
    %337 = vmatpush.msra.mxu0 0.0
    %338 = vmatpush.msra.mxu0 0.0
    %339 = vmatpush.msra.mxu0 0.0
    %340 = vmatpush.msra.mxu0 0.0
    %341 = vmatpush.msra.mxu0 0.0
    %342 = vmatpush.msra.mxu0 0.0
    %343 = vmatpush.msra.mxu0 0.0
    %344 = vmatpush.msra.mxu0 %v145
    %345 = vmatpush.msra.mxu0 %v133
    %346 = vmatpush.msra.mxu0 %v121
    %347 = vmatpush.msra.mxu0 %v109
    %348 = vmatmul.f32.gmra.mxu0 %v150
    %v349 = vpop.f32.mrf.mxu0
    %v350 = vadd.f32 0.0, %v349
    %351 = vdwg.mxu0
    %352 = vmatpush.msra.mxu0 0.0
    %353 = vmatpush.msra.mxu0 0.0
    %354 = vmatpush.msra.mxu0 0.0
    %355 = vmatpush.msra.mxu0 0.0
    %356 = vmatpush.msra.mxu0 0.0
    %357 = vmatpush.msra.mxu0 0.0
    %358 = vmatpush.msra.mxu0 0.0
    %359 = vmatpush.msra.mxu0 0.0
    %360 = vmatpush.msra.mxu0 0.0
    %361 = vmatpush.msra.mxu0 0.0
    %362 = vmatpush.msra.mxu0 0.0
    %363 = vmatpush.msra.mxu0 0.0
    %364 = vmatpush.msra.mxu0 %v146
    %365 = vmatpush.msra.mxu0 %v134
    %366 = vmatpush.msra.mxu0 %v122
    %367 = vmatpush.msra.mxu0 %v110
    %368 = vmatmul.f32.gmra.mxu0 %v150
    %v369 = vpop.f32.mrf.mxu0
    %v370 = vadd.f32 0.0, %v369
    %371 = vdwg.mxu0
    %372 = vmatpush.msra.mxu0 0.0
    %373 = vmatpush.msra.mxu0 0.0
    %374 = vmatpush.msra.mxu0 0.0
    %375 = vmatpush.msra.mxu0 0.0
    %376 = vmatpush.msra.mxu0 0.0
    %377 = vmatpush.msra.mxu0 0.0
    %378 = vmatpush.msra.mxu0 0.0
    %379 = vmatpush.msra.mxu0 0.0
    %380 = vmatpush.msra.mxu0 0.0
    %381 = vmatpush.msra.mxu0 0.0
    %382 = vmatpush.msra.mxu0 0.0
    %383 = vmatpush.msra.mxu0 0.0
    %384 = vmatpush.msra.mxu0 %v147
    %385 = vmatpush.msra.mxu0 %v135
    %386 = vmatpush.msra.mxu0 %v123
    %387 = vmatpush.msra.mxu0 %v111
    %388 = vmatmul.f32.gmra.mxu0 %v150
    %v389 = vpop.f32.mrf.mxu0
    %v390 = vadd.f32 0.0, %v389
    %391 = vdwg.mxu0
    %v392 = vld [vmem:[#allocation8] sm:$0xff]
    %v393 = vld [vmem:[#allocation8 + $0x8] sm:$0xff]
    %v394 = vld [vmem:[#allocation8 + $0x10] sm:$0xff]
    %v395 = vld [vmem:[#allocation8 + $0x18] sm:$0xff]
    %v396 = vld [vmem:[#allocation8 + $0x20] sm:$0xff]
    %v397 = vld [vmem:[#allocation8 + $0x28] sm:$0xff]
    %v398 = vld [vmem:[#allocation8 + $0x30] sm:$0xff]
    %v399 = vld [vmem:[#allocation8 + $0x38] sm:$0xff]
    %v400 = vld [vmem:[#allocation8 + $0x40] sm:$0xff]
    %v401 = vld [vmem:[#allocation8 + $0x48] sm:$0xff]
    %v402 = vld [vmem:[#allocation8 + $0x50] sm:$0xff]
    %v403 = vld [vmem:[#allocation8 + $0x58] sm:$0xff]
    %v404 = vld [vmem:[#allocation8 + $0x60] sm:$0xff]
    %v405 = vld [vmem:[#allocation8 + $0x68] sm:$0xff]
    %v406 = vld [vmem:[#allocation8 + $0x70] sm:$0xff]
    %v407 = vld [vmem:[#allocation8 + $0x78] sm:$0xff]
    %v408 = vld [vmem:[#allocation8 + $0x80] sm:$0xff]
    %v409 = vld [vmem:[#allocation8 + $0x88] sm:$0xff]
    %v410 = vld [vmem:[#allocation8 + $0x90] sm:$0xff]
    %v411 = vld [vmem:[#allocation8 + $0x98] sm:$0xff]
    %v412 = vld [vmem:[#allocation8 + $0xa0] sm:$0xff]
    %v413 = vld [vmem:[#allocation8 + $0xa8] sm:$0xff]
    %v414 = vld [vmem:[#allocation8 + $0xb0] sm:$0xff]
    %v415 = vld [vmem:[#allocation8 + $0xb8] sm:$0xff]
    %v416 = vld [vmem:[#allocation8 + $0xc0] sm:$0xff]
    %v417 = vld [vmem:[#allocation8 + $0xc8] sm:$0xff]
    %v418 = vld [vmem:[#allocation8 + $0xd0] sm:$0xff]
    %v419 = vld [vmem:[#allocation8 + $0xd8] sm:$0xff]
    %v420 = vld [vmem:[#allocation8 + $0xe0] sm:$0xff]
    %v421 = vld [vmem:[#allocation8 + $0xe8] sm:$0xff]
    %v422 = vld [vmem:[#allocation8 + $0xf0] sm:$0xff]
    %v423 = vld [vmem:[#allocation8 + $0xf8] sm:$0xff]
    %v424 = vld [vmem:[#allocation8 + $0x100] sm:$0xff]
    %v425 = vld [vmem:[#allocation8 + $0x108] sm:$0xff]
    %v426 = vld [vmem:[#allocation8 + $0x110] sm:$0xff]
    %v427 = vld [vmem:[#allocation8 + $0x118] sm:$0xff]
    %v428 = vld [vmem:[#allocation8 + $0x120] sm:$0xff]
    %v429 = vld [vmem:[#allocation8 + $0x128] sm:$0xff]
    %v430 = vld [vmem:[#allocation8 + $0x130] sm:$0xff]
    %v431 = vld [vmem:[#allocation8 + $0x138] sm:$0xff]
    %v432 = vld [vmem:[#allocation8 + $0x140] sm:$0xff]
    %v433 = vld [vmem:[#allocation8 + $0x148] sm:$0xff]
    %v434 = vld [vmem:[#allocation8 + $0x150] sm:$0xff]
    %v435 = vld [vmem:[#allocation8 + $0x158] sm:$0xff]
    %v436 = vld [vmem:[#allocation8 + $0x160] sm:$0xff]
    %v437 = vld [vmem:[#allocation8 + $0x168] sm:$0xff]
    %v438 = vld [vmem:[#allocation8 + $0x170] sm:$0xff]
    %v439 = vld [vmem:[#allocation8 + $0x178] sm:$0xff]
    %v441 = vsel %vm148, %v98, 0
    %v444 = vsel %vm148, %v99, 0
    %446 = vmatpush.msra.mxu0 0.0
    %447 = vmatpush.msra.mxu0 0.0
    %448 = vmatpush.msra.mxu0 0.0
    %449 = vmatpush.msra.mxu0 0.0
    %450 = vmatpush.msra.mxu0 0.0
    %451 = vmatpush.msra.mxu0 0.0
    %452 = vmatpush.msra.mxu0 0.0
    %453 = vmatpush.msra.mxu0 0.0
    %454 = vmatpush.msra.mxu0 0.0
    %455 = vmatpush.msra.mxu0 0.0
    %456 = vmatpush.msra.mxu0 0.0
    %457 = vmatpush.msra.mxu0 0.0
    %458 = vmatpush.msra.mxu0 %v428
    %459 = vmatpush.msra.mxu0 %v416
    %460 = vmatpush.msra.mxu0 %v404
    %461 = vmatpush.msra.mxu0 %v392
    %462 = vmatmul.f32.gmra.mxu0 %v441
    %v463 = vpop.f32.mrf.mxu0
    %v464 = vadd.f32 0.0, %v463
    %465 = vmatmul.f32.gmra.mxu0 %v444
    %v466 = vpop.f32.mrf.mxu0
    %v467 = vadd.f32 0.0, %v466
    %468 = vdwg.mxu0
    %469 = vmatpush.msra.mxu0 0.0
    %470 = vmatpush.msra.mxu0 0.0
    %471 = vmatpush.msra.mxu0 0.0
    %472 = vmatpush.msra.mxu0 0.0
    %473 = vmatpush.msra.mxu0 0.0
    %474 = vmatpush.msra.mxu0 0.0
    %475 = vmatpush.msra.mxu0 0.0
    %476 = vmatpush.msra.mxu0 0.0
    %477 = vmatpush.msra.mxu0 0.0
    %478 = vmatpush.msra.mxu0 0.0
    %479 = vmatpush.msra.mxu0 0.0
    %480 = vmatpush.msra.mxu0 0.0
    %481 = vmatpush.msra.mxu0 %v429
    %482 = vmatpush.msra.mxu0 %v417
    %483 = vmatpush.msra.mxu0 %v405
    %484 = vmatpush.msra.mxu0 %v393
    %485 = vmatmul.f32.gmra.mxu0 %v441
    %v486 = vpop.f32.mrf.mxu0
    %v487 = vadd.f32 0.0, %v486
    %488 = vmatmul.f32.gmra.mxu0 %v444
    %v489 = vpop.f32.mrf.mxu0
    %v490 = vadd.f32 0.0, %v489
    %491 = vdwg.mxu0
    %492 = vmatpush.msra.mxu0 0.0
    %493 = vmatpush.msra.mxu0 0.0
    %494 = vmatpush.msra.mxu0 0.0
    %495 = vmatpush.msra.mxu0 0.0
    %496 = vmatpush.msra.mxu0 0.0
    %497 = vmatpush.msra.mxu0 0.0
    %498 = vmatpush.msra.mxu0 0.0
    %499 = vmatpush.msra.mxu0 0.0
    %500 = vmatpush.msra.mxu0 0.0
    %501 = vmatpush.msra.mxu0 0.0
    %502 = vmatpush.msra.mxu0 0.0
    %503 = vmatpush.msra.mxu0 0.0
    %504 = vmatpush.msra.mxu0 %v430
    %505 = vmatpush.msra.mxu0 %v418
    %506 = vmatpush.msra.mxu0 %v406
    %507 = vmatpush.msra.mxu0 %v394
    %508 = vmatmul.f32.gmra.mxu0 %v441
    %v509 = vpop.f32.mrf.mxu0
    %v510 = vadd.f32 0.0, %v509
    %511 = vmatmul.f32.gmra.mxu0 %v444
    %v512 = vpop.f32.mrf.mxu0
    %v513 = vadd.f32 0.0, %v512
    %514 = vdwg.mxu0
    %515 = vmatpush.msra.mxu0 0.0
    %516 = vmatpush.msra.mxu0 0.0
    %517 = vmatpush.msra.mxu0 0.0
    %518 = vmatpush.msra.mxu0 0.0
    %519 = vmatpush.msra.mxu0 0.0
    %520 = vmatpush.msra.mxu0 0.0
    %521 = vmatpush.msra.mxu0 0.0
    %522 = vmatpush.msra.mxu0 0.0
    %523 = vmatpush.msra.mxu0 0.0
    %524 = vmatpush.msra.mxu0 0.0
    %525 = vmatpush.msra.mxu0 0.0
    %526 = vmatpush.msra.mxu0 0.0
    %527 = vmatpush.msra.mxu0 %v431
    %528 = vmatpush.msra.mxu0 %v419
    %529 = vmatpush.msra.mxu0 %v407
    %530 = vmatpush.msra.mxu0 %v395
    %531 = vmatmul.f32.gmra.mxu0 %v441
    %v532 = vpop.f32.mrf.mxu0
    %v533 = vadd.f32 0.0, %v532
    %534 = vmatmul.f32.gmra.mxu0 %v444
    %v535 = vpop.f32.mrf.mxu0
    %v536 = vadd.f32 0.0, %v535
    %537 = vdwg.mxu0
    %538 = vmatpush.msra.mxu0 0.0
    %539 = vmatpush.msra.mxu0 0.0
    %540 = vmatpush.msra.mxu0 0.0
    %541 = vmatpush.msra.mxu0 0.0
    %542 = vmatpush.msra.mxu0 0.0
    %543 = vmatpush.msra.mxu0 0.0
    %544 = vmatpush.msra.mxu0 0.0
    %545 = vmatpush.msra.mxu0 0.0
    %546 = vmatpush.msra.mxu0 0.0
    %547 = vmatpush.msra.mxu0 0.0
    %548 = vmatpush.msra.mxu0 0.0
    %549 = vmatpush.msra.mxu0 0.0
    %550 = vmatpush.msra.mxu0 %v432
    %551 = vmatpush.msra.mxu0 %v420
    %552 = vmatpush.msra.mxu0 %v408
    %553 = vmatpush.msra.mxu0 %v396
    %554 = vmatmul.f32.gmra.mxu0 %v441
    %v555 = vpop.f32.mrf.mxu0
    %v556 = vadd.f32 0.0, %v555
    %557 = vmatmul.f32.gmra.mxu0 %v444
    %v558 = vpop.f32.mrf.mxu0
    %v559 = vadd.f32 0.0, %v558
    %560 = vdwg.mxu0
    %561 = vmatpush.msra.mxu0 0.0
    %562 = vmatpush.msra.mxu0 0.0
    %563 = vmatpush.msra.mxu0 0.0
    %564 = vmatpush.msra.mxu0 0.0
    %565 = vmatpush.msra.mxu0 0.0
    %566 = vmatpush.msra.mxu0 0.0
    %567 = vmatpush.msra.mxu0 0.0
    %568 = vmatpush.msra.mxu0 0.0
    %569 = vmatpush.msra.mxu0 0.0
    %570 = vmatpush.msra.mxu0 0.0
    %571 = vmatpush.msra.mxu0 0.0
    %572 = vmatpush.msra.mxu0 0.0
    %573 = vmatpush.msra.mxu0 %v433
    %574 = vmatpush.msra.mxu0 %v421
    %575 = vmatpush.msra.mxu0 %v409
    %576 = vmatpush.msra.mxu0 %v397
    %577 = vmatmul.f32.gmra.mxu0 %v441
    %v578 = vpop.f32.mrf.mxu0
    %v579 = vadd.f32 0.0, %v578
    %580 = vmatmul.f32.gmra.mxu0 %v444
    %v581 = vpop.f32.mrf.mxu0
    %v582 = vadd.f32 0.0, %v581
    %583 = vdwg.mxu0
    %584 = vmatpush.msra.mxu0 0.0
    %585 = vmatpush.msra.mxu0 0.0
    %586 = vmatpush.msra.mxu0 0.0
    %587 = vmatpush.msra.mxu0 0.0
    %588 = vmatpush.msra.mxu0 0.0
    %589 = vmatpush.msra.mxu0 0.0
    %590 = vmatpush.msra.mxu0 0.0
    %591 = vmatpush.msra.mxu0 0.0
    %592 = vmatpush.msra.mxu0 0.0
    %593 = vmatpush.msra.mxu0 0.0
    %594 = vmatpush.msra.mxu0 0.0
    %595 = vmatpush.msra.mxu0 0.0
    %596 = vmatpush.msra.mxu0 %v434
    %597 = vmatpush.msra.mxu0 %v422
    %598 = vmatpush.msra.mxu0 %v410
    %599 = vmatpush.msra.mxu0 %v398
    %600 = vmatmul.f32.gmra.mxu0 %v441
    %v601 = vpop.f32.mrf.mxu0
    %v602 = vadd.f32 0.0, %v601
    %603 = vmatmul.f32.gmra.mxu0 %v444
    %v604 = vpop.f32.mrf.mxu0
    %v605 = vadd.f32 0.0, %v604
    %606 = vdwg.mxu0
    %607 = vmatpush.msra.mxu0 0.0
    %608 = vmatpush.msra.mxu0 0.0
    %609 = vmatpush.msra.mxu0 0.0
    %610 = vmatpush.msra.mxu0 0.0
    %611 = vmatpush.msra.mxu0 0.0
    %612 = vmatpush.msra.mxu0 0.0
    %613 = vmatpush.msra.mxu0 0.0
    %614 = vmatpush.msra.mxu0 0.0
    %615 = vmatpush.msra.mxu0 0.0
    %616 = vmatpush.msra.mxu0 0.0
    %617 = vmatpush.msra.mxu0 0.0
    %618 = vmatpush.msra.mxu0 0.0
    %619 = vmatpush.msra.mxu0 %v435
    %620 = vmatpush.msra.mxu0 %v423
    %621 = vmatpush.msra.mxu0 %v411
    %622 = vmatpush.msra.mxu0 %v399
    %623 = vmatmul.f32.gmra.mxu0 %v441
    %v624 = vpop.f32.mrf.mxu0
    %v625 = vadd.f32 0.0, %v624
    %626 = vmatmul.f32.gmra.mxu0 %v444
    %v627 = vpop.f32.mrf.mxu0
    %v628 = vadd.f32 0.0, %v627
    %629 = vdwg.mxu0
    %630 = vmatpush.msra.mxu0 0.0
    %631 = vmatpush.msra.mxu0 0.0
    %632 = vmatpush.msra.mxu0 0.0
    %633 = vmatpush.msra.mxu0 0.0
    %634 = vmatpush.msra.mxu0 0.0
    %635 = vmatpush.msra.mxu0 0.0
    %636 = vmatpush.msra.mxu0 0.0
    %637 = vmatpush.msra.mxu0 0.0
    %638 = vmatpush.msra.mxu0 0.0
    %639 = vmatpush.msra.mxu0 0.0
    %640 = vmatpush.msra.mxu0 0.0
    %641 = vmatpush.msra.mxu0 0.0
    %642 = vmatpush.msra.mxu0 %v436
    %643 = vmatpush.msra.mxu0 %v424
    %644 = vmatpush.msra.mxu0 %v412
    %645 = vmatpush.msra.mxu0 %v400
    %646 = vmatmul.f32.gmra.mxu0 %v441
    %v647 = vpop.f32.mrf.mxu0
    %v648 = vadd.f32 0.0, %v647
    %649 = vmatmul.f32.gmra.mxu0 %v444
    %v650 = vpop.f32.mrf.mxu0
    %v651 = vadd.f32 0.0, %v650
    %652 = vdwg.mxu0
    %653 = vmatpush.msra.mxu0 0.0
    %654 = vmatpush.msra.mxu0 0.0
    %655 = vmatpush.msra.mxu0 0.0
    %656 = vmatpush.msra.mxu0 0.0
    %657 = vmatpush.msra.mxu0 0.0
    %658 = vmatpush.msra.mxu0 0.0
    %659 = vmatpush.msra.mxu0 0.0
    %660 = vmatpush.msra.mxu0 0.0
    %661 = vmatpush.msra.mxu0 0.0
    %662 = vmatpush.msra.mxu0 0.0
    %663 = vmatpush.msra.mxu0 0.0
    %664 = vmatpush.msra.mxu0 0.0
    %665 = vmatpush.msra.mxu0 %v437
    %666 = vmatpush.msra.mxu0 %v425
    %667 = vmatpush.msra.mxu0 %v413
    %668 = vmatpush.msra.mxu0 %v401
    %669 = vmatmul.f32.gmra.mxu0 %v441
    %v670 = vpop.f32.mrf.mxu0
    %v671 = vadd.f32 0.0, %v670
    %672 = vmatmul.f32.gmra.mxu0 %v444
    %v673 = vpop.f32.mrf.mxu0
    %v674 = vadd.f32 0.0, %v673
    %675 = vdwg.mxu0
    %676 = vmatpush.msra.mxu0 0.0
    %677 = vmatpush.msra.mxu0 0.0
    %678 = vmatpush.msra.mxu0 0.0
    %679 = vmatpush.msra.mxu0 0.0
    %680 = vmatpush.msra.mxu0 0.0
    %681 = vmatpush.msra.mxu0 0.0
    %682 = vmatpush.msra.mxu0 0.0
    %683 = vmatpush.msra.mxu0 0.0
    %684 = vmatpush.msra.mxu0 0.0
    %685 = vmatpush.msra.mxu0 0.0
    %686 = vmatpush.msra.mxu0 0.0
    %687 = vmatpush.msra.mxu0 0.0
    %688 = vmatpush.msra.mxu0 %v438
    %689 = vmatpush.msra.mxu0 %v426
    %690 = vmatpush.msra.mxu0 %v414
    %691 = vmatpush.msra.mxu0 %v402
    %692 = vmatmul.f32.gmra.mxu0 %v441
    %v693 = vpop.f32.mrf.mxu0
    %v694 = vadd.f32 0.0, %v693
    %695 = vmatmul.f32.gmra.mxu0 %v444
    %v696 = vpop.f32.mrf.mxu0
    %v697 = vadd.f32 0.0, %v696
    %698 = vdwg.mxu0
    %699 = vmatpush.msra.mxu0 0.0
    %700 = vmatpush.msra.mxu0 0.0
    %701 = vmatpush.msra.mxu0 0.0
    %702 = vmatpush.msra.mxu0 0.0
    %703 = vmatpush.msra.mxu0 0.0
    %704 = vmatpush.msra.mxu0 0.0
    %705 = vmatpush.msra.mxu0 0.0
    %706 = vmatpush.msra.mxu0 0.0
    %707 = vmatpush.msra.mxu0 0.0
    %708 = vmatpush.msra.mxu0 0.0
    %709 = vmatpush.msra.mxu0 0.0
    %710 = vmatpush.msra.mxu0 0.0
    %711 = vmatpush.msra.mxu0 %v439
    %712 = vmatpush.msra.mxu0 %v427
    %713 = vmatpush.msra.mxu0 %v415
    %714 = vmatpush.msra.mxu0 %v403
    %715 = vmatmul.f32.gmra.mxu0 %v441
    %v716 = vpop.f32.mrf.mxu0
    %v717 = vadd.f32 0.0, %v716
    %718 = vmatmul.f32.gmra.mxu0 %v444
    %v719 = vpop.f32.mrf.mxu0
    %v720 = vadd.f32 0.0, %v719
    %721 = vdwg.mxu0
    %v734 = vrot.slane %v190, 7
    %v735 = vrot.slane %v210, 6
    %v736 = vrot.slane %v230, 5
    %v737 = vrot.slane %v250, 4
    %v738 = vrot.slane %v270, 3
    %v739 = vrot.slane %v290, 2
    %v740 = vrot.slane %v310, 1
    %v741 = vrot.slane %v350, 7
    %v742 = vrot.slane %v370, 6
    %v743 = vrot.slane %v390, 5
    %vm744 = vcmask 1040384
    %v745 = vsel %vm744, %v170, %v734
    %vm746 = vcmask 1042434
    %v747 = vsel %vm746, %v735, %v736
    %vm748 = vcmask 1041408
    %v749 = vsel %vm748, %v745, %v747
    %vm750 = vcmask 1044484
    %v751 = vsel %vm750, %v737, %v738
    %vm752 = vcmask 1046534
    %v753 = vsel %vm752, %v739, %v740
    %vm754 = vcmask 1045508
    %v755 = vsel %vm754, %v751, %v753
    %vm756 = vcmask 1043456
    %v757 = vsel %vm756, %v749, %v755
    %v758 = vsel %vm744, %v330, %v741
    %v759 = vsel %vm746, %v742, %v743
    %v760 = vsel %vm748, %v758, %v759
    %vm761 = vcmask 1041409
    %v762 = vsel %vm761, %v170, %v734
    %vm763 = vcmask 1043459
    %v764 = vsel %vm763, %v735, %v736
    %vm765 = vcmask 1042433
    %v766 = vsel %vm765, %v762, %v764
    %vm767 = vcmask 1045509
    %v768 = vsel %vm767, %v737, %v738
    %vm769 = vcmask 1046528
    %v770 = vsel %vm769, %v740, %v739
    %vm771 = vcmask 1046533
    %v772 = vsel %vm771, %v768, %v770
    %vm773 = vcmask 1044481
    %v774 = vsel %vm773, %v766, %v772
    %v775 = vrot.slane %v774, 1
    %v776 = vsel %vm761, %v330, %v741
    %v777 = vsel %vm763, %v742, %v743
    %v778 = vsel %vm765, %v776, %v777
    %v779 = vrot.slane %v778, 1
    %v780 = vperm.slane %v757, 0
    %v781 = vperm.slane %v757, 1
    %v782 = vperm.slane %v757, 2
    %v783 = vperm.slane %v757, 3
    %v784 = vperm.slane %v757, 4
    %v785 = vperm.slane %v757, 5
    %v786 = vperm.slane %v757, 6
    %v787 = vperm.slane %v757, 7
    %v788 = vperm.slane %v760, 0
    %v789 = vperm.slane %v760, 1
    %v790 = vperm.slane %v760, 2
    %v791 = vperm.slane %v760, 3
    %v792 = vperm.slane %v775, 0
    %v793 = vperm.slane %v775, 1
    %v794 = vperm.slane %v775, 2
    %v795 = vperm.slane %v775, 3
    %v796 = vperm.slane %v775, 4
    %v797 = vperm.slane %v775, 5
    %v798 = vperm.slane %v775, 6
    %v799 = vperm.slane %v775, 7
    %v800 = vperm.slane %v779, 0
    %v801 = vperm.slane %v779, 1
    %v802 = vperm.slane %v779, 2
    %v803 = vperm.slane %v779, 3
    %v828 = vadd.f32 %v464, %v780
    %v829 = vadd.f32 %v487, %v781
    %v830 = vadd.f32 %v510, %v782
    %v831 = vadd.f32 %v533, %v783
    %v832 = vadd.f32 %v556, %v784
    %v833 = vadd.f32 %v579, %v785
    %v834 = vadd.f32 %v602, %v786
    %v835 = vadd.f32 %v625, %v787
    %v836 = vadd.f32 %v648, %v788
    %v837 = vadd.f32 %v671, %v789
    %v838 = vadd.f32 %v694, %v790
    %v839 = vadd.f32 %v717, %v791
    %v840 = vadd.f32 %v467, %v792
    %v841 = vadd.f32 %v490, %v793
    %v842 = vadd.f32 %v513, %v794
    %v843 = vadd.f32 %v536, %v795
    %v844 = vadd.f32 %v559, %v796
    %v845 = vadd.f32 %v582, %v797
    %v846 = vadd.f32 %v605, %v798
    %v847 = vadd.f32 %v628, %v799
    %v848 = vadd.f32 %v651, %v800
    %v849 = vadd.f32 %v674, %v801
    %v850 = vadd.f32 %v697, %v802
    %v851 = vadd.f32 %v720, %v803
    %v852 = vtanh.pop %v828
    %v853 = vtanh.pop %v829
    %v854 = vtanh.pop %v830
    %v855 = vtanh.pop %v831
    %v856 = vtanh.pop %v832
    %v857 = vtanh.pop %v833
    %v858 = vtanh.pop %v834
    %v859 = vtanh.pop %v835
    %v860 = vtanh.pop %v836
    %v861 = vtanh.pop %v837
    %v862 = vtanh.pop %v838
    %v863 = vtanh.pop %v839
    %v864 = vtanh.pop %v840
    %v865 = vtanh.pop %v841
    %v866 = vtanh.pop %v842
    %v867 = vtanh.pop %v843
    %v868 = vtanh.pop %v844
    %v869 = vtanh.pop %v845
    %v870 = vtanh.pop %v846
    %v871 = vtanh.pop %v847
    %v872 = vtanh.pop %v848
    %v873 = vtanh.pop %v849
    %v874 = vtanh.pop %v850
    %v875 = vtanh.pop %v851
    %v876 = vld [vmem:[#allocation10] sm:$0xff]
    %v877 = vld [vmem:[#allocation10 + $0x8] sm:$0xff]
    %v878 = vld [vmem:[#allocation10 + $0x10] sm:$0xff]
    %v879 = vld [vmem:[#allocation10 + $0x18] sm:$0xff]
    %v880 = vld [vmem:[#allocation10 + $0x20] sm:$0xff]
    %v881 = vld [vmem:[#allocation10 + $0x28] sm:$0xff]
    %v882 = vld [vmem:[#allocation10 + $0x30] sm:$0xff]
    %v883 = vld [vmem:[#allocation10 + $0x38] sm:$0xff]
    %v884 = vld [vmem:[#allocation10 + $0x40] sm:$0xff]
    %v885 = vld [vmem:[#allocation10 + $0x48] sm:$0xff]
    %v886 = vld [vmem:[#allocation10 + $0x50] sm:$0xff]
    %v887 = vld [vmem:[#allocation10 + $0x58] sm:$0xff]
    %v888 = vld [vmem:[#allocation10 + $0x60] sm:$0xff]
    %v889 = vld [vmem:[#allocation10 + $0x68] sm:$0xff]
    %v890 = vld [vmem:[#allocation10 + $0x70] sm:$0xff]
    %v891 = vld [vmem:[#allocation10 + $0x78] sm:$0xff]
    %v892 = vld [vmem:[#allocation10 + $0x80] sm:$0xff]
    %v893 = vld [vmem:[#allocation10 + $0x88] sm:$0xff]
    %v894 = vld [vmem:[#allocation10 + $0x90] sm:$0xff]
    %v895 = vld [vmem:[#allocation10 + $0x98] sm:$0xff]
    %v896 = vld [vmem:[#allocation10 + $0xa0] sm:$0xff]
    %v897 = vld [vmem:[#allocation10 + $0xa8] sm:$0xff]
    %v898 = vld [vmem:[#allocation10 + $0xb0] sm:$0xff]
    %v899 = vld [vmem:[#allocation10 + $0xb8] sm:$0xff]
    %v900 = vld [vmem:[#allocation10 + $0xc0] sm:$0xff]
    %v901 = vld [vmem:[#allocation10 + $0xc8] sm:$0xff]
    %v902 = vld [vmem:[#allocation10 + $0xd0] sm:$0xff]
    %v903 = vld [vmem:[#allocation10 + $0xd8] sm:$0xff]
    %v904 = vld [vmem:[#allocation10 + $0xe0] sm:$0xff]
    %v905 = vld [vmem:[#allocation10 + $0xe8] sm:$0xff]
    %v906 = vld [vmem:[#allocation10 + $0xf0] sm:$0xff]
    %v907 = vld [vmem:[#allocation10 + $0xf8] sm:$0xff]
    %v908 = vld [vmem:[#allocation10 + $0x100] sm:$0xff]
    %v909 = vld [vmem:[#allocation10 + $0x108] sm:$0xff]
    %v910 = vld [vmem:[#allocation10 + $0x110] sm:$0xff]
    %v911 = vld [vmem:[#allocation10 + $0x118] sm:$0xff]
    %v912 = vld [vmem:[#allocation10 + $0x120] sm:$0xff]
    %v913 = vld [vmem:[#allocation10 + $0x128] sm:$0xff]
    %v914 = vld [vmem:[#allocation10 + $0x130] sm:$0xff]
    %v915 = vld [vmem:[#allocation10 + $0x138] sm:$0xff]
    %v916 = vld [vmem:[#allocation10 + $0x140] sm:$0xff]
    %v917 = vld [vmem:[#allocation10 + $0x148] sm:$0xff]
    %v918 = vld [vmem:[#allocation10 + $0x150] sm:$0xff]
    %v919 = vld [vmem:[#allocation10 + $0x158] sm:$0xff]
    %v920 = vld [vmem:[#allocation10 + $0x160] sm:$0xff]
    %v921 = vld [vmem:[#allocation10 + $0x168] sm:$0xff]
    %v922 = vld [vmem:[#allocation10 + $0x170] sm:$0xff]
    %v923 = vld [vmem:[#allocation10 + $0x178] sm:$0xff]
    %v924 = vld [vmem:[#allocation10 + $0x180] sm:$0xff]
    %v925 = vld [vmem:[#allocation10 + $0x188] sm:$0xff]
    %v926 = vld [vmem:[#allocation10 + $0x190] sm:$0xff]
    %v927 = vld [vmem:[#allocation10 + $0x198] sm:$0xff]
    %v928 = vld [vmem:[#allocation10 + $0x1a0] sm:$0xff]
    %v929 = vld [vmem:[#allocation10 + $0x1a8] sm:$0xff]
    %v930 = vld [vmem:[#allocation10 + $0x1b0] sm:$0xff]
    %v931 = vld [vmem:[#allocation10 + $0x1b8] sm:$0xff]
    %v932 = vld [vmem:[#allocation10 + $0x1c0] sm:$0xff]
    %v933 = vld [vmem:[#allocation10 + $0x1c8] sm:$0xff]
    %v934 = vld [vmem:[#allocation10 + $0x1d0] sm:$0xff]
    %v935 = vld [vmem:[#allocation10 + $0x1d8] sm:$0xff]
    %v936 = vld [vmem:[#allocation10 + $0x1e0] sm:$0xff]
    %v937 = vld [vmem:[#allocation10 + $0x1e8] sm:$0xff]
    %v938 = vld [vmem:[#allocation10 + $0x1f0] sm:$0xff]
    %v939 = vld [vmem:[#allocation10 + $0x1f8] sm:$0xff]
    %v940 = vld [vmem:[#allocation10 + $0x200] sm:$0xff]
    %v941 = vld [vmem:[#allocation10 + $0x208] sm:$0xff]
    %v942 = vld [vmem:[#allocation10 + $0x210] sm:$0xff]
    %v943 = vld [vmem:[#allocation10 + $0x218] sm:$0xff]
    %v944 = vld [vmem:[#allocation10 + $0x220] sm:$0xff]
    %v945 = vld [vmem:[#allocation10 + $0x228] sm:$0xff]
    %v946 = vld [vmem:[#allocation10 + $0x230] sm:$0xff]
    %v947 = vld [vmem:[#allocation10 + $0x238] sm:$0xff]
    %v948 = vld [vmem:[#allocation10 + $0x240] sm:$0xff]
    %v949 = vld [vmem:[#allocation10 + $0x248] sm:$0xff]
    %v950 = vld [vmem:[#allocation10 + $0x250] sm:$0xff]
    %v951 = vld [vmem:[#allocation10 + $0x258] sm:$0xff]
    %v952 = vld [vmem:[#allocation10 + $0x260] sm:$0xff]
    %v953 = vld [vmem:[#allocation10 + $0x268] sm:$0xff]
    %v954 = vld [vmem:[#allocation10 + $0x270] sm:$0xff]
    %v955 = vld [vmem:[#allocation10 + $0x278] sm:$0xff]
    %v956 = vld [vmem:[#allocation10 + $0x280] sm:$0xff]
    %v957 = vld [vmem:[#allocation10 + $0x288] sm:$0xff]
    %v958 = vld [vmem:[#allocation10 + $0x290] sm:$0xff]
    %v959 = vld [vmem:[#allocation10 + $0x298] sm:$0xff]
    %v960 = vld [vmem:[#allocation10 + $0x2a0] sm:$0xff]
    %v961 = vld [vmem:[#allocation10 + $0x2a8] sm:$0xff]
    %v962 = vld [vmem:[#allocation10 + $0x2b0] sm:$0xff]
    %v963 = vld [vmem:[#allocation10 + $0x2b8] sm:$0xff]
    %v964 = vld [vmem:[#allocation10 + $0x2c0] sm:$0xff]
    %v965 = vld [vmem:[#allocation10 + $0x2c8] sm:$0xff]
    %v966 = vld [vmem:[#allocation10 + $0x2d0] sm:$0xff]
    %v967 = vld [vmem:[#allocation10 + $0x2d8] sm:$0xff]
    %v968 = vld [vmem:[#allocation10 + $0x2e0] sm:$0xff]
    %v969 = vld [vmem:[#allocation10 + $0x2e8] sm:$0xff]
    %v970 = vld [vmem:[#allocation10 + $0x2f0] sm:$0xff]
    %v971 = vld [vmem:[#allocation10 + $0x2f8] sm:$0xff]
    %v972 = vld [vmem:[#allocation10 + $0x300] sm:$0xff]
    %v973 = vld [vmem:[#allocation10 + $0x308] sm:$0xff]
    %v974 = vld [vmem:[#allocation10 + $0x310] sm:$0xff]
    %v975 = vld [vmem:[#allocation10 + $0x318] sm:$0xff]
    %v976 = vld [vmem:[#allocation10 + $0x320] sm:$0xff]
    %v977 = vld [vmem:[#allocation10 + $0x328] sm:$0xff]
    %v978 = vld [vmem:[#allocation10 + $0x330] sm:$0xff]
    %v979 = vld [vmem:[#allocation10 + $0x338] sm:$0xff]
    %v980 = vld [vmem:[#allocation10 + $0x340] sm:$0xff]
    %v981 = vld [vmem:[#allocation10 + $0x348] sm:$0xff]
    %v982 = vld [vmem:[#allocation10 + $0x350] sm:$0xff]
    %v983 = vld [vmem:[#allocation10 + $0x358] sm:$0xff]
    %v984 = vld [vmem:[#allocation10 + $0x360] sm:$0xff]
    %v985 = vld [vmem:[#allocation10 + $0x368] sm:$0xff]
    %v986 = vld [vmem:[#allocation10 + $0x370] sm:$0xff]
    %v987 = vld [vmem:[#allocation10 + $0x378] sm:$0xff]
    %v988 = vld [vmem:[#allocation10 + $0x380] sm:$0xff]
    %v989 = vld [vmem:[#allocation10 + $0x388] sm:$0xff]
    %v990 = vld [vmem:[#allocation10 + $0x390] sm:$0xff]
    %v991 = vld [vmem:[#allocation10 + $0x398] sm:$0xff]
    %v992 = vld [vmem:[#allocation10 + $0x3a0] sm:$0xff]
    %v993 = vld [vmem:[#allocation10 + $0x3a8] sm:$0xff]
    %v994 = vld [vmem:[#allocation10 + $0x3b0] sm:$0xff]
    %v995 = vld [vmem:[#allocation10 + $0x3b8] sm:$0xff]
    %v996 = vld [vmem:[#allocation10 + $0x3c0] sm:$0xff]
    %v997 = vld [vmem:[#allocation10 + $0x3c8] sm:$0xff]
    %v998 = vld [vmem:[#allocation10 + $0x3d0] sm:$0xff]
    %v999 = vld [vmem:[#allocation10 + $0x3d8] sm:$0xff]
    %v1000 = vld [vmem:[#allocation10 + $0x3e0] sm:$0xff]
    %v1001 = vld [vmem:[#allocation10 + $0x3e8] sm:$0xff]
    %v1002 = vld [vmem:[#allocation10 + $0x3f0] sm:$0xff]
    %v1003 = vld [vmem:[#allocation10 + $0x3f8] sm:$0xff]
    %v1004 = vld [vmem:[#allocation10 + $0x400] sm:$0xff]
    %v1005 = vld [vmem:[#allocation10 + $0x408] sm:$0xff]
    %v1006 = vld [vmem:[#allocation10 + $0x410] sm:$0xff]
    %v1007 = vld [vmem:[#allocation10 + $0x418] sm:$0xff]
    %v1008 = vld [vmem:[#allocation10 + $0x420] sm:$0xff]
    %v1009 = vld [vmem:[#allocation10 + $0x428] sm:$0xff]
    %v1010 = vld [vmem:[#allocation10 + $0x430] sm:$0xff]
    %v1011 = vld [vmem:[#allocation10 + $0x438] sm:$0xff]
    %v1012 = vld [vmem:[#allocation10 + $0x440] sm:$0xff]
    %v1013 = vld [vmem:[#allocation10 + $0x448] sm:$0xff]
    %v1014 = vld [vmem:[#allocation10 + $0x450] sm:$0xff]
    %v1015 = vld [vmem:[#allocation10 + $0x458] sm:$0xff]
    %v1016 = vld [vmem:[#allocation10 + $0x460] sm:$0xff]
    %v1017 = vld [vmem:[#allocation10 + $0x468] sm:$0xff]
    %v1018 = vld [vmem:[#allocation10 + $0x470] sm:$0xff]
    %v1019 = vld [vmem:[#allocation10 + $0x478] sm:$0xff]
    %v1020 = vld [vmem:[#allocation10 + $0x480] sm:$0xff]
    %v1021 = vld [vmem:[#allocation10 + $0x488] sm:$0xff]
    %v1022 = vld [vmem:[#allocation10 + $0x490] sm:$0xff]
    %v1023 = vld [vmem:[#allocation10 + $0x498] sm:$0xff]
    %v1024 = vld [vmem:[#allocation10 + $0x4a0] sm:$0xff]
    %v1025 = vld [vmem:[#allocation10 + $0x4a8] sm:$0xff]
    %v1026 = vld [vmem:[#allocation10 + $0x4b0] sm:$0xff]
    %v1027 = vld [vmem:[#allocation10 + $0x4b8] sm:$0xff]
    %v1028 = vld [vmem:[#allocation10 + $0x4c0] sm:$0xff]
    %v1029 = vld [vmem:[#allocation10 + $0x4c8] sm:$0xff]
    %v1030 = vld [vmem:[#allocation10 + $0x4d0] sm:$0xff]
    %v1031 = vld [vmem:[#allocation10 + $0x4d8] sm:$0xff]
    %v1032 = vld [vmem:[#allocation10 + $0x4e0] sm:$0xff]
    %v1033 = vld [vmem:[#allocation10 + $0x4e8] sm:$0xff]
    %v1034 = vld [vmem:[#allocation10 + $0x4f0] sm:$0xff]
    %v1035 = vld [vmem:[#allocation10 + $0x4f8] sm:$0xff]
    %v1036 = vld [vmem:[#allocation10 + $0x500] sm:$0xff]
    %v1037 = vld [vmem:[#allocation10 + $0x508] sm:$0xff]
    %v1038 = vld [vmem:[#allocation10 + $0x510] sm:$0xff]
    %v1039 = vld [vmem:[#allocation10 + $0x518] sm:$0xff]
    %v1040 = vld [vmem:[#allocation10 + $0x520] sm:$0xff]
    %v1041 = vld [vmem:[#allocation10 + $0x528] sm:$0xff]
    %v1042 = vld [vmem:[#allocation10 + $0x530] sm:$0xff]
    %v1043 = vld [vmem:[#allocation10 + $0x538] sm:$0xff]
    %v1044 = vld [vmem:[#allocation10 + $0x540] sm:$0xff]
    %v1045 = vld [vmem:[#allocation10 + $0x548] sm:$0xff]
    %v1046 = vld [vmem:[#allocation10 + $0x550] sm:$0xff]
    %v1047 = vld [vmem:[#allocation10 + $0x558] sm:$0xff]
    %v1048 = vld [vmem:[#allocation10 + $0x560] sm:$0xff]
    %v1049 = vld [vmem:[#allocation10 + $0x568] sm:$0xff]
    %v1050 = vld [vmem:[#allocation10 + $0x570] sm:$0xff]
    %v1051 = vld [vmem:[#allocation10 + $0x578] sm:$0xff]
    %v1052 = vld [vmem:[#allocation10 + $0x580] sm:$0xff]
    %v1053 = vld [vmem:[#allocation10 + $0x588] sm:$0xff]
    %v1054 = vld [vmem:[#allocation10 + $0x590] sm:$0xff]
    %v1055 = vld [vmem:[#allocation10 + $0x598] sm:$0xff]
    %v1056 = vld [vmem:[#allocation10 + $0x5a0] sm:$0xff]
    %v1057 = vld [vmem:[#allocation10 + $0x5a8] sm:$0xff]
    %v1058 = vld [vmem:[#allocation10 + $0x5b0] sm:$0xff]
    %v1059 = vld [vmem:[#allocation10 + $0x5b8] sm:$0xff]
    %v1060 = vld [vmem:[#allocation10 + $0x5c0] sm:$0xff]
    %v1061 = vld [vmem:[#allocation10 + $0x5c8] sm:$0xff]
    %v1062 = vld [vmem:[#allocation10 + $0x5d0] sm:$0xff]
    %v1063 = vld [vmem:[#allocation10 + $0x5d8] sm:$0xff]
    %v1064 = vld [vmem:[#allocation10 + $0x5e0] sm:$0xff]
    %v1065 = vld [vmem:[#allocation10 + $0x5e8] sm:$0xff]
    %v1066 = vld [vmem:[#allocation10 + $0x5f0] sm:$0xff]
    %v1067 = vld [vmem:[#allocation10 + $0x5f8] sm:$0xff]
    %1068 = vmatpush.msra.mxu0 %v891
    %1069 = vmatpush.msra.mxu0 %v890
    %1070 = vmatpush.msra.mxu0 %v889
    %1071 = vmatpush.msra.mxu0 %v888
    %1072 = vmatpush.msra.mxu0 %v887
    %1073 = vmatpush.msra.mxu0 %v886
    %1074 = vmatpush.msra.mxu0 %v885
    %1075 = vmatpush.msra.mxu0 %v884
    %1076 = vmatpush.msra.mxu0 %v883
    %1077 = vmatpush.msra.mxu0 %v882
    %1078 = vmatpush.msra.mxu0 %v881
    %1079 = vmatpush.msra.mxu0 %v880
    %1080 = vmatpush.msra.mxu0 %v879
    %1081 = vmatpush.msra.mxu0 %v878
    %1082 = vmatpush.msra.mxu0 %v877
    %1083 = vmatpush.msra.mxu0 %v876
    %1084 = vmatmul.f32.gmra.mxu0 %v852
    %v1085 = vpop.f32.mrf.mxu0
    %v1086 = vadd.f32 0.0, %v1085
    %1087 = vmatmul.f32.gmra.mxu0 %v864
    %v1088 = vpop.f32.mrf.mxu0
    %v1089 = vadd.f32 0.0, %v1088
    %1090 = vdwg.mxu0
    %1091 = vmatpush.msra.mxu0 %v907
    %1092 = vmatpush.msra.mxu0 %v906
    %1093 = vmatpush.msra.mxu0 %v905
    %1094 = vmatpush.msra.mxu0 %v904
    %1095 = vmatpush.msra.mxu0 %v903
    %1096 = vmatpush.msra.mxu0 %v902
    %1097 = vmatpush.msra.mxu0 %v901
    %1098 = vmatpush.msra.mxu0 %v900
    %1099 = vmatpush.msra.mxu0 %v899
    %1100 = vmatpush.msra.mxu0 %v898
    %1101 = vmatpush.msra.mxu0 %v897
    %1102 = vmatpush.msra.mxu0 %v896
    %1103 = vmatpush.msra.mxu0 %v895
    %1104 = vmatpush.msra.mxu0 %v894
    %1105 = vmatpush.msra.mxu0 %v893
    %1106 = vmatpush.msra.mxu0 %v892
    %1107 = vmatmul.f32.gmra.mxu0 %v853
    %v1108 = vpop.f32.mrf.mxu0
    %v1109 = vadd.f32 %v1086, %v1108
    %1110 = vmatmul.f32.gmra.mxu0 %v865
    %v1111 = vpop.f32.mrf.mxu0
    %v1112 = vadd.f32 %v1089, %v1111
    %1113 = vdwg.mxu0
    %1114 = vmatpush.msra.mxu0 %v923
    %1115 = vmatpush.msra.mxu0 %v922
    %1116 = vmatpush.msra.mxu0 %v921
    %1117 = vmatpush.msra.mxu0 %v920
    %1118 = vmatpush.msra.mxu0 %v919
    %1119 = vmatpush.msra.mxu0 %v918
    %1120 = vmatpush.msra.mxu0 %v917
    %1121 = vmatpush.msra.mxu0 %v916
    %1122 = vmatpush.msra.mxu0 %v915
    %1123 = vmatpush.msra.mxu0 %v914
    %1124 = vmatpush.msra.mxu0 %v913
    %1125 = vmatpush.msra.mxu0 %v912
    %1126 = vmatpush.msra.mxu0 %v911
    %1127 = vmatpush.msra.mxu0 %v910
    %1128 = vmatpush.msra.mxu0 %v909
    %1129 = vmatpush.msra.mxu0 %v908
    %1130 = vmatmul.f32.gmra.mxu0 %v854
    %v1131 = vpop.f32.mrf.mxu0
    %v1132 = vadd.f32 %v1109, %v1131
    %1133 = vmatmul.f32.gmra.mxu0 %v866
    %v1134 = vpop.f32.mrf.mxu0
    %v1135 = vadd.f32 %v1112, %v1134
    %1136 = vdwg.mxu0
    %1137 = vmatpush.msra.mxu0 %v939
    %1138 = vmatpush.msra.mxu0 %v938
    %1139 = vmatpush.msra.mxu0 %v937
    %1140 = vmatpush.msra.mxu0 %v936
    %1141 = vmatpush.msra.mxu0 %v935
    %1142 = vmatpush.msra.mxu0 %v934
    %1143 = vmatpush.msra.mxu0 %v933
    %1144 = vmatpush.msra.mxu0 %v932
    %1145 = vmatpush.msra.mxu0 %v931
    %1146 = vmatpush.msra.mxu0 %v930
    %1147 = vmatpush.msra.mxu0 %v929
    %1148 = vmatpush.msra.mxu0 %v928
    %1149 = vmatpush.msra.mxu0 %v927
    %1150 = vmatpush.msra.mxu0 %v926
    %1151 = vmatpush.msra.mxu0 %v925
    %1152 = vmatpush.msra.mxu0 %v924
    %1153 = vmatmul.f32.gmra.mxu0 %v855
    %v1154 = vpop.f32.mrf.mxu0
    %v1155 = vadd.f32 %v1132, %v1154
    %1156 = vmatmul.f32.gmra.mxu0 %v867
    %v1157 = vpop.f32.mrf.mxu0
    %v1158 = vadd.f32 %v1135, %v1157
    %1159 = vdwg.mxu0
    %1160 = vmatpush.msra.mxu0 %v955
    %1161 = vmatpush.msra.mxu0 %v954
    %1162 = vmatpush.msra.mxu0 %v953
    %1163 = vmatpush.msra.mxu0 %v952
    %1164 = vmatpush.msra.mxu0 %v951
    %1165 = vmatpush.msra.mxu0 %v950
    %1166 = vmatpush.msra.mxu0 %v949
    %1167 = vmatpush.msra.mxu0 %v948
    %1168 = vmatpush.msra.mxu0 %v947
    %1169 = vmatpush.msra.mxu0 %v946
    %1170 = vmatpush.msra.mxu0 %v945
    %1171 = vmatpush.msra.mxu0 %v944
    %1172 = vmatpush.msra.mxu0 %v943
    %1173 = vmatpush.msra.mxu0 %v942
    %1174 = vmatpush.msra.mxu0 %v941
    %1175 = vmatpush.msra.mxu0 %v940
    %1176 = vmatmul.f32.gmra.mxu0 %v856
    %v1177 = vpop.f32.mrf.mxu0
    %v1178 = vadd.f32 %v1155, %v1177
    %1179 = vmatmul.f32.gmra.mxu0 %v868
    %v1180 = vpop.f32.mrf.mxu0
    %v1181 = vadd.f32 %v1158, %v1180
    %1182 = vdwg.mxu0
    %1183 = vmatpush.msra.mxu0 %v971
    %1184 = vmatpush.msra.mxu0 %v970
    %1185 = vmatpush.msra.mxu0 %v969
    %1186 = vmatpush.msra.mxu0 %v968
    %1187 = vmatpush.msra.mxu0 %v967
    %1188 = vmatpush.msra.mxu0 %v966
    %1189 = vmatpush.msra.mxu0 %v965
    %1190 = vmatpush.msra.mxu0 %v964
    %1191 = vmatpush.msra.mxu0 %v963
    %1192 = vmatpush.msra.mxu0 %v962
    %1193 = vmatpush.msra.mxu0 %v961
    %1194 = vmatpush.msra.mxu0 %v960
    %1195 = vmatpush.msra.mxu0 %v959
    %1196 = vmatpush.msra.mxu0 %v958
    %1197 = vmatpush.msra.mxu0 %v957
    %1198 = vmatpush.msra.mxu0 %v956
    %1199 = vmatmul.f32.gmra.mxu0 %v857
    %v1200 = vpop.f32.mrf.mxu0
    %v1201 = vadd.f32 %v1178, %v1200
    %1202 = vmatmul.f32.gmra.mxu0 %v869
    %v1203 = vpop.f32.mrf.mxu0
    %v1204 = vadd.f32 %v1181, %v1203
    %1205 = vdwg.mxu0
    %1206 = vmatpush.msra.mxu0 %v987
    %1207 = vmatpush.msra.mxu0 %v986
    %1208 = vmatpush.msra.mxu0 %v985
    %1209 = vmatpush.msra.mxu0 %v984
    %1210 = vmatpush.msra.mxu0 %v983
    %1211 = vmatpush.msra.mxu0 %v982
    %1212 = vmatpush.msra.mxu0 %v981
    %1213 = vmatpush.msra.mxu0 %v980
    %1214 = vmatpush.msra.mxu0 %v979
    %1215 = vmatpush.msra.mxu0 %v978
    %1216 = vmatpush.msra.mxu0 %v977
    %1217 = vmatpush.msra.mxu0 %v976
    %1218 = vmatpush.msra.mxu0 %v975
    %1219 = vmatpush.msra.mxu0 %v974
    %1220 = vmatpush.msra.mxu0 %v973
    %1221 = vmatpush.msra.mxu0 %v972
    %1222 = vmatmul.f32.gmra.mxu0 %v858
    %v1223 = vpop.f32.mrf.mxu0
    %v1224 = vadd.f32 %v1201, %v1223
    %1225 = vmatmul.f32.gmra.mxu0 %v870
    %v1226 = vpop.f32.mrf.mxu0
    %v1227 = vadd.f32 %v1204, %v1226
    %1228 = vdwg.mxu0
    %1229 = vmatpush.msra.mxu0 %v1003
    %1230 = vmatpush.msra.mxu0 %v1002
    %1231 = vmatpush.msra.mxu0 %v1001
    %1232 = vmatpush.msra.mxu0 %v1000
    %1233 = vmatpush.msra.mxu0 %v999
    %1234 = vmatpush.msra.mxu0 %v998
    %1235 = vmatpush.msra.mxu0 %v997
    %1236 = vmatpush.msra.mxu0 %v996
    %1237 = vmatpush.msra.mxu0 %v995
    %1238 = vmatpush.msra.mxu0 %v994
    %1239 = vmatpush.msra.mxu0 %v993
    %1240 = vmatpush.msra.mxu0 %v992
    %1241 = vmatpush.msra.mxu0 %v991
    %1242 = vmatpush.msra.mxu0 %v990
    %1243 = vmatpush.msra.mxu0 %v989
    %1244 = vmatpush.msra.mxu0 %v988
    %1245 = vmatmul.f32.gmra.mxu0 %v859
    %v1246 = vpop.f32.mrf.mxu0
    %v1247 = vadd.f32 %v1224, %v1246
    %1248 = vmatmul.f32.gmra.mxu0 %v871
    %v1249 = vpop.f32.mrf.mxu0
    %v1250 = vadd.f32 %v1227, %v1249
    %1251 = vdwg.mxu0
    %1252 = vmatpush.msra.mxu0 %v1019
    %1253 = vmatpush.msra.mxu0 %v1018
    %1254 = vmatpush.msra.mxu0 %v1017
    %1255 = vmatpush.msra.mxu0 %v1016
    %1256 = vmatpush.msra.mxu0 %v1015
    %1257 = vmatpush.msra.mxu0 %v1014
    %1258 = vmatpush.msra.mxu0 %v1013
    %1259 = vmatpush.msra.mxu0 %v1012
    %1260 = vmatpush.msra.mxu0 %v1011
    %1261 = vmatpush.msra.mxu0 %v1010
    %1262 = vmatpush.msra.mxu0 %v1009
    %1263 = vmatpush.msra.mxu0 %v1008
    %1264 = vmatpush.msra.mxu0 %v1007
    %1265 = vmatpush.msra.mxu0 %v1006
    %1266 = vmatpush.msra.mxu0 %v1005
    %1267 = vmatpush.msra.mxu0 %v1004
    %1268 = vmatmul.f32.gmra.mxu0 %v860
    %v1269 = vpop.f32.mrf.mxu0
    %v1270 = vadd.f32 %v1247, %v1269
    %1271 = vmatmul.f32.gmra.mxu0 %v872
    %v1272 = vpop.f32.mrf.mxu0
    %v1273 = vadd.f32 %v1250, %v1272
    %1274 = vdwg.mxu0
    %1275 = vmatpush.msra.mxu0 %v1035
    %1276 = vmatpush.msra.mxu0 %v1034
    %1277 = vmatpush.msra.mxu0 %v1033
    %1278 = vmatpush.msra.mxu0 %v1032
    %1279 = vmatpush.msra.mxu0 %v1031
    %1280 = vmatpush.msra.mxu0 %v1030
    %1281 = vmatpush.msra.mxu0 %v1029
    %1282 = vmatpush.msra.mxu0 %v1028
    %1283 = vmatpush.msra.mxu0 %v1027
    %1284 = vmatpush.msra.mxu0 %v1026
    %1285 = vmatpush.msra.mxu0 %v1025
    %1286 = vmatpush.msra.mxu0 %v1024
    %1287 = vmatpush.msra.mxu0 %v1023
    %1288 = vmatpush.msra.mxu0 %v1022
    %1289 = vmatpush.msra.mxu0 %v1021
    %1290 = vmatpush.msra.mxu0 %v1020
    %1291 = vmatmul.f32.gmra.mxu0 %v861
    %v1292 = vpop.f32.mrf.mxu0
    %v1293 = vadd.f32 %v1270, %v1292
    %1294 = vmatmul.f32.gmra.mxu0 %v873
    %v1295 = vpop.f32.mrf.mxu0
    %v1296 = vadd.f32 %v1273, %v1295
    %1297 = vdwg.mxu0
    %1298 = vmatpush.msra.mxu0 %v1051
    %1299 = vmatpush.msra.mxu0 %v1050
    %1300 = vmatpush.msra.mxu0 %v1049
    %1301 = vmatpush.msra.mxu0 %v1048
    %1302 = vmatpush.msra.mxu0 %v1047
    %1303 = vmatpush.msra.mxu0 %v1046
    %1304 = vmatpush.msra.mxu0 %v1045
    %1305 = vmatpush.msra.mxu0 %v1044
    %1306 = vmatpush.msra.mxu0 %v1043
    %1307 = vmatpush.msra.mxu0 %v1042
    %1308 = vmatpush.msra.mxu0 %v1041
    %1309 = vmatpush.msra.mxu0 %v1040
    %1310 = vmatpush.msra.mxu0 %v1039
    %1311 = vmatpush.msra.mxu0 %v1038
    %1312 = vmatpush.msra.mxu0 %v1037
    %1313 = vmatpush.msra.mxu0 %v1036
    %1314 = vmatmul.f32.gmra.mxu0 %v862
    %v1315 = vpop.f32.mrf.mxu0
    %v1316 = vadd.f32 %v1293, %v1315
    %1317 = vmatmul.f32.gmra.mxu0 %v874
    %v1318 = vpop.f32.mrf.mxu0
    %v1319 = vadd.f32 %v1296, %v1318
    %1320 = vdwg.mxu0
    %1321 = vmatpush.msra.mxu0 %v1067
    %1322 = vmatpush.msra.mxu0 %v1066
    %1323 = vmatpush.msra.mxu0 %v1065
    %1324 = vmatpush.msra.mxu0 %v1064
    %1325 = vmatpush.msra.mxu0 %v1063
    %1326 = vmatpush.msra.mxu0 %v1062
    %1327 = vmatpush.msra.mxu0 %v1061
    %1328 = vmatpush.msra.mxu0 %v1060
    %1329 = vmatpush.msra.mxu0 %v1059
    %1330 = vmatpush.msra.mxu0 %v1058
    %1331 = vmatpush.msra.mxu0 %v1057
    %1332 = vmatpush.msra.mxu0 %v1056
    %1333 = vmatpush.msra.mxu0 %v1055
    %1334 = vmatpush.msra.mxu0 %v1054
    %1335 = vmatpush.msra.mxu0 %v1053
    %1336 = vmatpush.msra.mxu0 %v1052
    %1337 = vmatmul.f32.gmra.mxu0 %v863
    %v1338 = vpop.f32.mrf.mxu0
    %v1339 = vadd.f32 %v1316, %v1338
    %1340 = vmatmul.f32.gmra.mxu0 %v875
    %v1341 = vpop.f32.mrf.mxu0
    %v1342 = vadd.f32 %v1319, %v1341
    %1343 = vdwg.mxu0
    %vm1344 = vcmask 15360
    %v1345 = vsel %vm1344, %v1339, -inf
    %v1346 = vrot.slane %v1345, 4
    %v1347 = vmax.f32 %v1345, %v1346
    %v1348 = vrot.slane %v1347, 2
    %v1349 = vmax.f32 %v1347, %v1348
    %v1350 = vrot.slane %v1349, 1
    %v1351 = vmax.f32 %v1349, %v1350
    %v1352 = vsel %vm1344, %v1342, -inf
    %v1353 = vrot.slane %v1352, 4
    %v1354 = vmax.f32 %v1352, %v1353
    %v1355 = vrot.slane %v1354, 2
    %v1356 = vmax.f32 %v1354, %v1355
    %v1357 = vrot.slane %v1356, 1
    %v1358 = vmax.f32 %v1356, %v1357
    %v1359 = vsub.f32 %v1339, %v1351
    %v1360 = vsub.f32 %v1342, %v1358
    %v1361 = vmul.f32 %v1359, 1.442695
    %v1362 = vpow.pop %v1361
    %v1363 = vmul.f32 %v1360, 1.442695
    %v1364 = vpow.pop %v1363
    %v1365 = vsel %vm1344, %v1362, 0.0
    %v1366 = vrot.slane %v1365, 4
    %v1367 = vadd.f32 %v1365, %v1366
    %v1368 = vrot.slane %v1367, 2
    %v1369 = vadd.f32 %v1367, %v1368
    %v1370 = vrot.slane %v1369, 1
    %v1371 = vadd.f32 %v1369, %v1370
    %v1372 = vsel %vm1344, %v1364, 0.0
    %v1373 = vrot.slane %v1372, 4
    %v1374 = vadd.f32 %v1372, %v1373
    %v1375 = vrot.slane %v1374, 2
    %v1376 = vadd.f32 %v1374, %v1375
    %v1377 = vrot.slane %v1376, 1
    %v1378 = vadd.f32 %v1376, %v1377
    %v1379 = vrcp.pop %v1371
    %v1380 = vrcp.pop %v1378
    %v1381 = vmul.f32 %v1362, %v1379
    %v1382 = vmul.f32 %v1364, %v1380
    %1384 = vset.pattern.permute.xlu0 1
    %1385 = vperm.xlu0 %1384, %v1381
    %v1386 = vpop.permute.xlu0 %1385
    %1389 = vset.pattern.permute.xlu0 1
    %1390 = vperm.xlu0 %1389, %v1382
    %v1391 = vpop.permute.xlu0 %1390
    %v1393 = vmul.f32 %v98, %v1386
    %v1394 = vmul.f32 %v99, %v1391
    %v1395 = vsel %vm148, %v1393, 0.0
    %v1396 = vrot.slane %v1395, 4
    %v1397 = vadd.f32 %v1395, %v1396
    %v1398 = vrot.slane %v1397, 2
    %v1399 = vadd.f32 %v1397, %v1398
    %v1400 = vrot.slane %v1399, 1
    %v1401 = vadd.f32 %v1399, %v1400
    %v1402 = vsel %vm148, %v1394, 0.0
    %v1403 = vrot.slane %v1402, 4
    %v1404 = vadd.f32 %v1402, %v1403
    %v1405 = vrot.slane %v1404, 2
    %v1406 = vadd.f32 %v1404, %v1405
    %v1407 = vrot.slane %v1406, 1
    %v1408 = vadd.f32 %v1406, %v1407
    %1409 = vst [vmem:[#allocation11] sm:$0x3] 0.0
    %1410 = vset.pattern.permute.xlu0 0
    %1411 = vperm.xlu0 %1410, %v1381
    %v1412 = vpop.permute.xlu0 %1411
    %1413 = vset.pattern.permute.xlu0 0
    %1414 = vperm.xlu0 %1413, %v1382
    %v1415 = vpop.permute.xlu0 %1414
    %v1416 = vlaneseq
    %v1417 = vand.u32 %v1416, 127
    %v1418 = vperm.slane %v1412, %v1417
    %v1419 = vperm.slane %v1415, %v1417
    %v1420 = vsel %vm761, %v1419, %v1418
    %vm1422 = vcmask 58368
    %1423 = vst.msk [vmem:[#allocation11] sm:$0x3] %vm1422, %v1420
    %v1424 = vadd.s32 %v1417, 4294967288
    %v1425 = vperm.slane %v1386, %v1424
    %v1426 = vperm.slane %v1391, %v1424
    %v1427 = vsel %vm761, %v1426, %v1425
    %vm1429 = vcmask 123968
    %1430 = vst.msk [vmem:[#allocation11] sm:$0x3] %vm1429, %v1427
    %v1433 = vsel %vm761, %v1408, %v1401
    %1434 = vrot.lane.b32.xlu0 %v1433, 16
    %v1435 = vpop.permute.xlu0 %1434
    %vm1437 = vcmask 386176
    %1438 = vst.msk [vmem:[#allocation11] sm:$0x3] %vm1437, %v1435
    // Predicated region
    $region42: #{tpu_custom_call.1} parent=1 // pred_check
      _
    $region43: #{tpu_custom_call.1} parent=1 // pred_check_branch
      %1440 = sbr.rel (0) target = $region45
    $region44: #{tpu_custom_call.1} parent=1 // pred_region
      %1442 = vsyncadd [#allocation4], 0
      %s1444 = sshll.u32 [#allocation11], 4
      %s1445 = int_to_ptr.vmem [resolvable:$true] %s1444
      %s1446 = sshll.u32 %s5, 4
      %s1447 = int_to_ptr.hbm [resolvable:$true] %s1446
      %1449 = dma.vmem_to_hbm [thread:$0]  %s1445, 32, %s1447, [#allocation4]
    $region45: #{tpu_custom_call.1} parent=1 // pred_fallthru
      _
    // Predicated region
    $region46: #{tpu_custom_call.1} parent=1 // pred_check
      _
    $region47: #{tpu_custom_call.1} parent=1 // pred_check_branch
      %1451 = sbr.rel (0) target = $region49
    $region48: #{tpu_custom_call.1} parent=1 // pred_region
      %1453 = dma.done [#allocation4], 32
    $region49: #{tpu_custom_call.1} parent=1 // pred_fallthru
      _
    %1454 = vsyncpa [#allocation3], 1
    %1455 = vsyncpa [#allocation6], 1
    %1456 = vsyncpa [#allocation9], 1
    %1457 = vsyncpa [#allocation4], 1

</llo_original>
